<compile_context>
chip_gen: v6e
topology: v6e:2x2x1
jax: 0.10.0
libtpu: 0.0.40
codegen_flags: <defaults>
</compile_context>

<pallas_src>
import functools

import jax
import jax.numpy as jnp
from jax.experimental import pallas as pl
from jax.experimental.pallas import tpu as pltpu  # noqa: F401  (TPU target)

# --- model hyperparameters (mirroring the PyTorch module) ---
N_EMBED = 32
BLOCK_SIZE = 8
NUM_HEADS = 4
HEAD_SIZE = N_EMBED // NUM_HEADS
VOCAB_SIZE = 65          # len(chars) for the usual tiny-shakespeare charset
VOCAB_PAD = 128          # lane-dense padded vocab for the lm_head output
TAB_PAD = 128            # padded row count of the packed [tok; pos] table


def bigram_kernel(idx_ref,        # VMEM (B*T, 1) int32 token ids
                  tab_ref,        # VMEM (TAB_PAD, C) packed [tok_table; pos_table; 0]
                  wqkv_ref,       # VMEM (C, 3*H*hs) packed, pre-transposed Q|K|V
                  w1_ref,         # VMEM (C, C)   ffwd weight, pre-transposed (in, out)
                  b1_ref,         # VMEM (1, C)
                  w2_ref,         # VMEM (C, VOCAB_PAD) lm_head, pre-transposed + padded
                  b2_ref,         # VMEM (1, VOCAB_PAD) padded
                  out_ref,        # VMEM (B*T, VOCAB_PAD) logits (padded)
                  *, batch, seq):
    B, T = batch, seq
    BT = B * T
    C = N_EMBED
    H, hs = NUM_HEADS, HEAD_SIZE
    HD = H * hs
    scale = C ** (-0.5)            # note: scaled by n_embed, as in the PyTorch Head

    # --- fused token + position embedding: one-hot MXU gather (two 1s per row) ---
    lane = jax.lax.broadcasted_iota(jnp.int32, (BT, TAB_PAD), 1)
    rows = jax.lax.broadcasted_iota(jnp.int32, (BT, TAB_PAD), 0)
    tok_hit = lane == idx_ref[...]                       # (BT, TAB_PAD), lane-bcast idx
    pos_hit = lane == (VOCAB_SIZE + rows % T)            # position r % T per flat row
    onehot = (tok_hit | pos_hit).astype(jnp.float32)
    x = jnp.dot(onehot, tab_ref[...], preferred_element_type=jnp.float32)   # (BT, C)

    # --- fused QKV projection for all batches & heads (single MXU push) ---
    qkv = jnp.dot(x, wqkv_ref[...], preferred_element_type=jnp.float32)     # (BT, 3*HD)

    # --- per-(b,h) score tiles laid side-by-side along the lane axis ---
    tiles = []
    for b in range(B):
        qb = qkv[b * T:(b + 1) * T, 0:HD]
        kb = qkv[b * T:(b + 1) * T, HD:2 * HD]
        for h in range(H):
            q = qb[:, h * hs:(h + 1) * hs]
            k = kb[:, h * hs:(h + 1) * hs]
            # q @ k.T without an explicit in-kernel transpose
            tiles.append(jax.lax.dot_general(
                q, k, (((1,), (1,)), ((), ())),
                preferred_element_type=jnp.float32))                        # (T, T)
    scores = jnp.concatenate(tiles, axis=1) * scale                         # (T, B*H*T)

    # causal additive mask, hoisted & built once for the whole slab
    # (masked where key index > query index, per tile)
    rowq = jax.lax.broadcasted_iota(jnp.int32, (T, B * H * T), 0)
    colk = jax.lax.broadcasted_iota(jnp.int32, (T, B * H * T), 1) % T
    neg = jnp.where(colk > rowq, -jnp.inf, 0.0).astype(jnp.float32)
    scores = scores + neg

    # NOTE: original nanogpt does F.softmax(wei, dim=1) — normalizes over the
    # *query* axis; reproduced exactly here (axis=0), batched over all B*H tiles.
    # Exact divide: nothing here saturates the VALU/EUP, and it keeps tol at 1e-4.
    m = jnp.max(scores, axis=0, keepdims=True)
    e = jnp.exp(scores - m)
    s = jnp.sum(e, axis=0, keepdims=True)
    p = e / s                                                               # (T, B*H*T)

    # --- per-(b,h) p @ v, reassembled to (BT, HD) ---
    per_batch = []
    for b in range(B):
        vb = qkv[b * T:(b + 1) * T, 2 * HD:3 * HD]
        outs = []
        for h in range(H):
            ph = p[:, (b * H + h) * T:(b * H + h + 1) * T]                  # (T, T)
            v = vb[:, h * hs:(h + 1) * hs]
            outs.append(jnp.dot(ph, v, preferred_element_type=jnp.float32))  # (T, hs)
        per_batch.append(jnp.concatenate(outs, axis=1))                     # (T, HD)
    attn = jnp.concatenate(per_batch, axis=0)                               # (BT, HD)

    # --- feed-forward (Linear + ReLU), fused over the whole batch ---
    h1 = jnp.dot(attn, w1_ref[...], preferred_element_type=jnp.float32) + b1_ref[...]
    h1 = jnp.maximum(h1, 0.0)                                               # (BT, C)

    # --- lm_head projection, lane-dense 128-wide output store ---
    logits = jnp.dot(h1, w2_ref[...], preferred_element_type=jnp.float32) + b2_ref[...]
    out_ref[...] = logits.astype(out_ref.dtype)                             # (BT, 128)


def pack_params(params):
    """Host-side re-layout: pack [tok; pos] table, pre-transpose, pad vocab to 128."""
    C = N_EMBED
    HD = NUM_HEADS * HEAD_SIZE
    # packed embedding table: rows [0, V) tok, rows [V, V+T) pos, rest zeros
    table = jnp.zeros((TAB_PAD, C), jnp.float32)
    table = table.at[:VOCAB_SIZE].set(params["tok_table"])
    table = table.at[VOCAB_SIZE:VOCAB_SIZE + BLOCK_SIZE].set(params["pos_table"])
    # per-head (out, in) -> packed (in, H*out)
    wq = jnp.transpose(params["wq"], (2, 0, 1)).reshape(C, HD)
    wk = jnp.transpose(params["wk"], (2, 0, 1)).reshape(C, HD)
    wv = jnp.transpose(params["wv"], (2, 0, 1)).reshape(C, HD)
    wqkv = jnp.concatenate([wq, wk, wv], axis=1)                            # (C, 3*HD)
    w1t = params["w1"].T                                                    # (in, out)
    w2t = jnp.zeros((C, VOCAB_PAD), jnp.float32).at[:, :VOCAB_SIZE].set(params["w2"].T)
    b2p = jnp.zeros((1, VOCAB_PAD), jnp.float32).at[:, :VOCAB_SIZE].set(params["b2"])
    return {
        "table": table,
        "wqkv": wqkv,
        "w1t": w1t,
        "b1": params["b1"],
        "w2t": w2t,
        "b2p": b2p,
    }


def bigram_forward(idx, packed):
    """idx: (B, T) int32 token ids.  Returns logits (B, T, VOCAB_SIZE)."""
    B, T = idx.shape
    BT = B * T
    idx_col = idx.reshape(BT, 1).astype(jnp.int32)

    args = (
        idx_col,
        packed["table"],
        packed["wqkv"],
        packed["w1t"], packed["b1"],
        packed["w2t"], packed["b2p"],
    )

    def vmem_full(a):
        nd = a.ndim
        return pl.BlockSpec(a.shape, lambda *_, _nd=nd: (0,) * _nd)

    in_specs = [vmem_full(a) for a in args]

    # advisory cost estimate so XLA can overlap this few-µs call with neighbors
    C, H, hs = N_EMBED, NUM_HEADS, HEAD_SIZE
    HD = H * hs
    flops = (2 * BT * TAB_PAD * C            # one-hot embedding gather
             + 2 * BT * C * 3 * HD           # fused QKV
             + 2 * B * H * 2 * T * T * hs    # q@k.T and p@v per head
             + 2 * BT * C * C                # feed-forward
             + 2 * BT * C * VOCAB_PAD)       # lm_head
    bytes_accessed = int(sum(a.size * a.dtype.itemsize for a in args)
                         + BT * VOCAB_PAD * 4)
    cost = pl.CostEstimate(flops=flops,
                           transcendentals=B * H * T * T,
                           bytes_accessed=bytes_accessed)

    out = pl.pallas_call(
        functools.partial(bigram_kernel, batch=B, seq=T),
        out_shape=jax.ShapeDtypeStruct((BT, VOCAB_PAD), jnp.float32),
        in_specs=in_specs,
        out_specs=pl.BlockSpec((BT, VOCAB_PAD), lambda *_: (0, 0)),
        cost_estimate=cost,
    )(*args)
    return out.reshape(B, T, VOCAB_PAD)[:, :, :VOCAB_SIZE]


def init_params(key):
    keys = jax.random.split(key, 10)
    s = 0.02
    params = {
        "tok_table": jax.random.normal(keys[0], (VOCAB_SIZE, N_EMBED), jnp.float32) * s,
        "pos_table": jax.random.normal(keys[1], (BLOCK_SIZE, N_EMBED), jnp.float32) * s,
        # per-head projection weights, PyTorch Linear convention: (out, in)
        "wq": jax.random.normal(keys[2], (NUM_HEADS, HEAD_SIZE, N_EMBED), jnp.float32) * s,
        "wk": jax.random.normal(keys[3], (NUM_HEADS, HEAD_SIZE, N_EMBED), jnp.float32) * s,
        "wv": jax.random.normal(keys[4], (NUM_HEADS, HEAD_SIZE, N_EMBED), jnp.float32) * s,
        "w1": jax.random.normal(keys[5], (N_EMBED, N_EMBED), jnp.float32) * s,
        "b1": jax.random.normal(keys[6], (1, N_EMBED), jnp.float32) * s,
        "w2": jax.random.normal(keys[7], (VOCAB_SIZE, N_EMBED), jnp.float32) * s,
        "b2": jax.random.normal(keys[8], (1, VOCAB_SIZE), jnp.float32) * s,
    }
    return params


def bigram_forward_ref(idx, params):
    """Pure-JAX reference mirroring the PyTorch forward (targets=None)."""
    B, T = idx.shape
    x = params["tok_table"][idx] + params["pos_table"][jnp.arange(T)][None]
    C = x.shape[-1]
    row = jnp.arange(T)[:, None]
    col = jnp.arange(T)[None, :]
    mask = col > row
    head_outs = []
    for h in range(NUM_HEADS):
        q = x @ params["wq"][h].T
        k = x @ params["wk"][h].T
        v = x @ params["wv"][h].T
        wei = jnp.einsum("btd,bsd->bts", q, k) * C ** (-0.5)
        wei = jnp.where(mask[None], -jnp.inf, wei)
        wei = jax.nn.softmax(wei, axis=1)       # dim=1 quirk reproduced
        head_outs.append(jnp.einsum("bts,bsd->btd", wei, v))
    attn = jnp.concatenate(head_outs, axis=-1)
    h1 = jnp.maximum(attn @ params["w1"].T + params["b1"][0], 0.0)
    return h1 @ params["w2"].T + params["b2"][0]


if __name__ == "__main__":
    key = jax.random.PRNGKey(0)
    pkey, ikey = jax.random.split(key)
    params = init_params(pkey)
    packed = pack_params(params)

    B, T = 2, BLOCK_SIZE
    idx = jax.random.randint(ikey, (B, T), 0, VOCAB_SIZE, dtype=jnp.int32)

    logits = bigram_forward(idx, packed)
    logits = jax.block_until_ready(logits)

    ref = bigram_forward_ref(idx, params)
    assert logits.shape == (B, T, VOCAB_SIZE)
    assert jnp.allclose(logits, ref, atol=1e-4, rtol=1e-4)

    # TODO(synk): loss branch (cross_entropy on permuted logits) and generate()
    # (multinomial sampling loop) are host-side training/decoding glue, not part
    # of the kernel hot path.
    print("KERNEL_OK")
</pallas_src>

<mosaic_0001>
module attributes {stable_mosaic.version = 11 : i64} {
  func.func @bigram_kernel(%arg0: memref<16x1xi32, #tpu.memory_space<vmem>>, %arg1: memref<128x32xf32, #tpu.memory_space<vmem>>, %arg2: memref<32x96xf32, #tpu.memory_space<vmem>>, %arg3: memref<32x32xf32, #tpu.memory_space<vmem>>, %arg4: memref<1x32xf32, #tpu.memory_space<vmem>>, %arg5: memref<32x128xf32, #tpu.memory_space<vmem>>, %arg6: memref<1x128xf32, #tpu.memory_space<vmem>>, %arg7: memref<16x128xf32, #tpu.memory_space<vmem>>) attributes {dimension_semantics = [], scalar_prefetch = 0 : i64, scratch_operands = 0 : i64, tpu.core_type = #tpu.core_type<tc>} {
    %0 = tpu.iota {dimensions = array<i32: 1>} : vector<16x128xi32>
    %1 = tpu.iota {dimensions = array<i32: 0>} : vector<16x128xi32>
    %c0 = arith.constant 0 : index
    %c0_0 = arith.constant 0 : index
    %2 = vector.load %arg0[%c0, %c0_0] : memref<16x1xi32, #tpu.memory_space<vmem>>, vector<16x1xi32>
    %3 = vector.broadcast %2 : vector<16x1xi32> to vector<16x128xi32>
    %4 = arith.cmpi eq, %0, %3 : vector<16x128xi32>
    %c8_i32 = arith.constant 8 : i32
    %c0_i32 = arith.constant 0 : i32
    %5 = arith.cmpi eq, %c8_i32, %c0_i32 : i32
    %c1_i32 = arith.constant 1 : i32
    %6 = arith.select %5, %c1_i32, %c8_i32 : i32
    %7 = vector.broadcast %6 : i32 to vector<16x128xi32>
    %8 = arith.remsi %1, %7 : vector<16x128xi32>
    %c0_i32_1 = arith.constant 0 : i32
    %9 = vector.broadcast %c0_i32_1 : i32 to vector<16x128xi32>
    %10 = arith.cmpi ne, %8, %9 : vector<16x128xi32>
    %c0_i32_2 = arith.constant 0 : i32
    %11 = vector.broadcast %c0_i32_2 : i32 to vector<16x128xi32>
    %12 = arith.cmpi slt, %8, %11 : vector<16x128xi32>
    %c0_i32_3 = arith.constant 0 : i32
    %13 = arith.cmpi slt, %6, %c0_i32_3 : i32
    %14 = vector.broadcast %13 : i1 to vector<16x128xi1>
    %15 = vector.broadcast %14 : vector<16x128xi1> to vector<16x128xi1>
    %16 = arith.xori %12, %15 : vector<16x128xi1>
    %17 = arith.andi %16, %10 : vector<16x128xi1>
    %18 = vector.broadcast %6 : i32 to vector<16x128xi32>
    %19 = arith.addi %8, %18 : vector<16x128xi32>
    %20 = arith.select %17, %19, %8 : vector<16x128xi1>, vector<16x128xi32>
    %c65_i32 = arith.constant 65 : i32
    %21 = vector.broadcast %c65_i32 : i32 to vector<16x128xi32>
    %22 = arith.addi %21, %20 : vector<16x128xi32>
    %23 = arith.cmpi eq, %0, %22 : vector<16x128xi32>
    %24 = arith.ori %4, %23 : vector<16x128xi1>
    %25 = arith.extui %24 : vector<16x128xi1> to vector<16x128xi32>
    %26 = arith.sitofp %25 : vector<16x128xi32> to vector<16x128xf32>
    %c0_4 = arith.constant 0 : index
    %c0_5 = arith.constant 0 : index
    %27 = vector.load %arg1[%c0_4, %c0_5] : memref<128x32xf32, #tpu.memory_space<vmem>>, vector<128x32xf32>
    %cst = arith.constant dense<0.000000e+00> : vector<16x32xf32>
    %28 = tpu.matmul %26, %27, %cst {dimension_numbers = #tpu.dot_dimension_numbers<[1], [0], [0], [1], [0, 0, 1, 1], [], []>} : vector<16x128xf32>, vector<128x32xf32>, vector<16x32xf32> -> vector<16x32xf32>
    %c0_6 = arith.constant 0 : index
    %c0_7 = arith.constant 0 : index
    %29 = vector.load %arg2[%c0_6, %c0_7] : memref<32x96xf32, #tpu.memory_space<vmem>>, vector<32x96xf32>
    %cst_8 = arith.constant dense<0.000000e+00> : vector<16x96xf32>
    %30 = tpu.matmul %28, %29, %cst_8 {dimension_numbers = #tpu.dot_dimension_numbers<[1], [0], [0], [1], [0, 0, 1, 1], [], []>} : vector<16x32xf32>, vector<32x96xf32>, vector<16x96xf32> -> vector<16x96xf32>
    %31 = vector.extract_strided_slice %30 {offsets = [0, 0], sizes = [8, 32], strides = [1, 1]} : vector<16x96xf32> to vector<8x32xf32>
    %32 = vector.extract_strided_slice %30 {offsets = [0, 32], sizes = [8, 32], strides = [1, 1]} : vector<16x96xf32> to vector<8x32xf32>
    %33 = vector.extract_strided_slice %31 {offsets = [0, 0], sizes = [8, 8], strides = [1, 1]} : vector<8x32xf32> to vector<8x8xf32>
    %34 = vector.extract_strided_slice %32 {offsets = [0, 0], sizes = [8, 8], strides = [1, 1]} : vector<8x32xf32> to vector<8x8xf32>
    %cst_9 = arith.constant dense<0.000000e+00> : vector<8x8xf32>
    %35 = tpu.matmul %33, %34, %cst_9 {dimension_numbers = #tpu.dot_dimension_numbers<[1], [1], [0], [0], [0, 0, 1, 0], [], []>} : vector<8x8xf32>, vector<8x8xf32>, vector<8x8xf32> -> vector<8x8xf32>
    %36 = vector.extract_strided_slice %31 {offsets = [0, 8], sizes = [8, 8], strides = [1, 1]} : vector<8x32xf32> to vector<8x8xf32>
    %37 = vector.extract_strided_slice %32 {offsets = [0, 8], sizes = [8, 8], strides = [1, 1]} : vector<8x32xf32> to vector<8x8xf32>
    %cst_10 = arith.constant dense<0.000000e+00> : vector<8x8xf32>
    %38 = tpu.matmul %36, %37, %cst_10 {dimension_numbers = #tpu.dot_dimension_numbers<[1], [1], [0], [0], [0, 0, 1, 0], [], []>} : vector<8x8xf32>, vector<8x8xf32>, vector<8x8xf32> -> vector<8x8xf32>
    %39 = vector.extract_strided_slice %31 {offsets = [0, 16], sizes = [8, 8], strides = [1, 1]} : vector<8x32xf32> to vector<8x8xf32>
    %40 = vector.extract_strided_slice %32 {offsets = [0, 16], sizes = [8, 8], strides = [1, 1]} : vector<8x32xf32> to vector<8x8xf32>
    %cst_11 = arith.constant dense<0.000000e+00> : vector<8x8xf32>
    %41 = tpu.matmul %39, %40, %cst_11 {dimension_numbers = #tpu.dot_dimension_numbers<[1], [1], [0], [0], [0, 0, 1, 0], [], []>} : vector<8x8xf32>, vector<8x8xf32>, vector<8x8xf32> -> vector<8x8xf32>
    %42 = vector.extract_strided_slice %31 {offsets = [0, 24], sizes = [8, 8], strides = [1, 1]} : vector<8x32xf32> to vector<8x8xf32>
    %43 = vector.extract_strided_slice %32 {offsets = [0, 24], sizes = [8, 8], strides = [1, 1]} : vector<8x32xf32> to vector<8x8xf32>
    %cst_12 = arith.constant dense<0.000000e+00> : vector<8x8xf32>
    %44 = tpu.matmul %42, %43, %cst_12 {dimension_numbers = #tpu.dot_dimension_numbers<[1], [1], [0], [0], [0, 0, 1, 0], [], []>} : vector<8x8xf32>, vector<8x8xf32>, vector<8x8xf32> -> vector<8x8xf32>
    %45 = vector.extract_strided_slice %30 {offsets = [8, 0], sizes = [8, 32], strides = [1, 1]} : vector<16x96xf32> to vector<8x32xf32>
    %46 = vector.extract_strided_slice %30 {offsets = [8, 32], sizes = [8, 32], strides = [1, 1]} : vector<16x96xf32> to vector<8x32xf32>
    %47 = vector.extract_strided_slice %45 {offsets = [0, 0], sizes = [8, 8], strides = [1, 1]} : vector<8x32xf32> to vector<8x8xf32>
    %48 = vector.extract_strided_slice %46 {offsets = [0, 0], sizes = [8, 8], strides = [1, 1]} : vector<8x32xf32> to vector<8x8xf32>
    %cst_13 = arith.constant dense<0.000000e+00> : vector<8x8xf32>
    %49 = tpu.matmul %47, %48, %cst_13 {dimension_numbers = #tpu.dot_dimension_numbers<[1], [1], [0], [0], [0, 0, 1, 0], [], []>} : vector<8x8xf32>, vector<8x8xf32>, vector<8x8xf32> -> vector<8x8xf32>
    %50 = vector.extract_strided_slice %45 {offsets = [0, 8], sizes = [8, 8], strides = [1, 1]} : vector<8x32xf32> to vector<8x8xf32>
    %51 = vector.extract_strided_slice %46 {offsets = [0, 8], sizes = [8, 8], strides = [1, 1]} : vector<8x32xf32> to vector<8x8xf32>
    %cst_14 = arith.constant dense<0.000000e+00> : vector<8x8xf32>
    %52 = tpu.matmul %50, %51, %cst_14 {dimension_numbers = #tpu.dot_dimension_numbers<[1], [1], [0], [0], [0, 0, 1, 0], [], []>} : vector<8x8xf32>, vector<8x8xf32>, vector<8x8xf32> -> vector<8x8xf32>
    %53 = vector.extract_strided_slice %45 {offsets = [0, 16], sizes = [8, 8], strides = [1, 1]} : vector<8x32xf32> to vector<8x8xf32>
    %54 = vector.extract_strided_slice %46 {offsets = [0, 16], sizes = [8, 8], strides = [1, 1]} : vector<8x32xf32> to vector<8x8xf32>
    %cst_15 = arith.constant dense<0.000000e+00> : vector<8x8xf32>
    %55 = tpu.matmul %53, %54, %cst_15 {dimension_numbers = #tpu.dot_dimension_numbers<[1], [1], [0], [0], [0, 0, 1, 0], [], []>} : vector<8x8xf32>, vector<8x8xf32>, vector<8x8xf32> -> vector<8x8xf32>
    %56 = vector.extract_strided_slice %45 {offsets = [0, 24], sizes = [8, 8], strides = [1, 1]} : vector<8x32xf32> to vector<8x8xf32>
    %57 = vector.extract_strided_slice %46 {offsets = [0, 24], sizes = [8, 8], strides = [1, 1]} : vector<8x32xf32> to vector<8x8xf32>
    %cst_16 = arith.constant dense<0.000000e+00> : vector<8x8xf32>
    %58 = tpu.matmul %56, %57, %cst_16 {dimension_numbers = #tpu.dot_dimension_numbers<[1], [1], [0], [0], [0, 0, 1, 0], [], []>} : vector<8x8xf32>, vector<8x8xf32>, vector<8x8xf32> -> vector<8x8xf32>
    %59 = tpu.concatenate %35, %38, %41, %44, %49, %52, %55, %58 in 1 : vector<8x8xf32>, vector<8x8xf32>, vector<8x8xf32>, vector<8x8xf32>, vector<8x8xf32>, vector<8x8xf32>, vector<8x8xf32>, vector<8x8xf32> -> vector<8x64xf32>
    %cst_17 = arith.constant 0.176776692 : f32
    %60 = vector.broadcast %cst_17 : f32 to vector<8x64xf32>
    %61 = arith.mulf %59, %60 : vector<8x64xf32>
    %62 = tpu.iota {dimensions = array<i32: 0>} : vector<8x64xi32>
    %63 = tpu.iota {dimensions = array<i32: 1>} : vector<8x64xi32>
    %c8_i32_18 = arith.constant 8 : i32
    %c0_i32_19 = arith.constant 0 : i32
    %64 = arith.cmpi eq, %c8_i32_18, %c0_i32_19 : i32
    %c1_i32_20 = arith.constant 1 : i32
    %65 = arith.select %64, %c1_i32_20, %c8_i32_18 : i32
    %66 = vector.broadcast %65 : i32 to vector<8x64xi32>
    %67 = arith.remsi %63, %66 : vector<8x64xi32>
    %c0_i32_21 = arith.constant 0 : i32
    %68 = vector.broadcast %c0_i32_21 : i32 to vector<8x64xi32>
    %69 = arith.cmpi ne, %67, %68 : vector<8x64xi32>
    %c0_i32_22 = arith.constant 0 : i32
    %70 = vector.broadcast %c0_i32_22 : i32 to vector<8x64xi32>
    %71 = arith.cmpi slt, %67, %70 : vector<8x64xi32>
    %c0_i32_23 = arith.constant 0 : i32
    %72 = arith.cmpi slt, %65, %c0_i32_23 : i32
    %73 = vector.broadcast %72 : i1 to vector<8x64xi1>
    %74 = vector.broadcast %73 : vector<8x64xi1> to vector<8x64xi1>
    %75 = arith.xori %71, %74 : vector<8x64xi1>
    %76 = arith.andi %75, %69 : vector<8x64xi1>
    %77 = vector.broadcast %65 : i32 to vector<8x64xi32>
    %78 = arith.addi %67, %77 : vector<8x64xi32>
    %79 = arith.select %76, %78, %67 : vector<8x64xi1>, vector<8x64xi32>
    %80 = arith.cmpi sgt, %79, %62 : vector<8x64xi32>
    %cst_24 = arith.constant 0xFF800000 : f32
    %cst_25 = arith.constant 0.000000e+00 : f32
    %81 = vector.broadcast %cst_24 : f32 to vector<8x64xf32>
    %82 = vector.broadcast %cst_25 : f32 to vector<8x64xf32>
    %83 = arith.select %80, %81, %82 : vector<8x64xi1>, vector<8x64xf32>
    %84 = arith.addf %61, %83 : vector<8x64xf32>
    %cst_26 = arith.constant dense<0xFF800000> : vector<64xf32>
    %85 = vector.multi_reduction <maximumf>, %84, %cst_26 [0] : vector<8x64xf32> to vector<64xf32>
    %86 = vector.shape_cast %85 : vector<64xf32> to vector<1x64xf32>
    %87 = vector.broadcast %86 : vector<1x64xf32> to vector<8x64xf32>
    %88 = arith.subf %84, %87 : vector<8x64xf32>
    %89 = math.exp %88 : vector<8x64xf32>
    %cst_27 = arith.constant dense<0.000000e+00> : vector<64xf32>
    %90 = vector.multi_reduction <add>, %89, %cst_27 [0] : vector<8x64xf32> to vector<64xf32>
    %91 = vector.shape_cast %90 : vector<64xf32> to vector<1x64xf32>
    %92 = vector.broadcast %91 : vector<1x64xf32> to vector<8x64xf32>
    %93 = arith.divf %89, %92 : vector<8x64xf32>
    %94 = vector.extract_strided_slice %30 {offsets = [0, 64], sizes = [8, 32], strides = [1, 1]} : vector<16x96xf32> to vector<8x32xf32>
    %95 = vector.extract_strided_slice %93 {offsets = [0, 0], sizes = [8, 8], strides = [1, 1]} : vector<8x64xf32> to vector<8x8xf32>
    %96 = vector.extract_strided_slice %94 {offsets = [0, 0], sizes = [8, 8], strides = [1, 1]} : vector<8x32xf32> to vector<8x8xf32>
    %cst_28 = arith.constant dense<0.000000e+00> : vector<8x8xf32>
    %97 = tpu.matmul %95, %96, %cst_28 {dimension_numbers = #tpu.dot_dimension_numbers<[1], [0], [0], [1], [0, 0, 1, 1], [], []>} : vector<8x8xf32>, vector<8x8xf32>, vector<8x8xf32> -> vector<8x8xf32>
    %98 = vector.extract_strided_slice %93 {offsets = [0, 8], sizes = [8, 8], strides = [1, 1]} : vector<8x64xf32> to vector<8x8xf32>
    %99 = vector.extract_strided_slice %94 {offsets = [0, 8], sizes = [8, 8], strides = [1, 1]} : vector<8x32xf32> to vector<8x8xf32>
    %cst_29 = arith.constant dense<0.000000e+00> : vector<8x8xf32>
    %100 = tpu.matmul %98, %99, %cst_29 {dimension_numbers = #tpu.dot_dimension_numbers<[1], [0], [0], [1], [0, 0, 1, 1], [], []>} : vector<8x8xf32>, vector<8x8xf32>, vector<8x8xf32> -> vector<8x8xf32>
    %101 = vector.extract_strided_slice %93 {offsets = [0, 16], sizes = [8, 8], strides = [1, 1]} : vector<8x64xf32> to vector<8x8xf32>
    %102 = vector.extract_strided_slice %94 {offsets = [0, 16], sizes = [8, 8], strides = [1, 1]} : vector<8x32xf32> to vector<8x8xf32>
    %cst_30 = arith.constant dense<0.000000e+00> : vector<8x8xf32>
    %103 = tpu.matmul %101, %102, %cst_30 {dimension_numbers = #tpu.dot_dimension_numbers<[1], [0], [0], [1], [0, 0, 1, 1], [], []>} : vector<8x8xf32>, vector<8x8xf32>, vector<8x8xf32> -> vector<8x8xf32>
    %104 = vector.extract_strided_slice %93 {offsets = [0, 24], sizes = [8, 8], strides = [1, 1]} : vector<8x64xf32> to vector<8x8xf32>
    %105 = vector.extract_strided_slice %94 {offsets = [0, 24], sizes = [8, 8], strides = [1, 1]} : vector<8x32xf32> to vector<8x8xf32>
    %cst_31 = arith.constant dense<0.000000e+00> : vector<8x8xf32>
    %106 = tpu.matmul %104, %105, %cst_31 {dimension_numbers = #tpu.dot_dimension_numbers<[1], [0], [0], [1], [0, 0, 1, 1], [], []>} : vector<8x8xf32>, vector<8x8xf32>, vector<8x8xf32> -> vector<8x8xf32>
    %107 = tpu.concatenate %97, %100, %103, %106 in 1 : vector<8x8xf32>, vector<8x8xf32>, vector<8x8xf32>, vector<8x8xf32> -> vector<8x32xf32>
    %108 = vector.extract_strided_slice %30 {offsets = [8, 64], sizes = [8, 32], strides = [1, 1]} : vector<16x96xf32> to vector<8x32xf32>
    %109 = vector.extract_strided_slice %93 {offsets = [0, 32], sizes = [8, 8], strides = [1, 1]} : vector<8x64xf32> to vector<8x8xf32>
    %110 = vector.extract_strided_slice %108 {offsets = [0, 0], sizes = [8, 8], strides = [1, 1]} : vector<8x32xf32> to vector<8x8xf32>
    %cst_32 = arith.constant dense<0.000000e+00> : vector<8x8xf32>
    %111 = tpu.matmul %109, %110, %cst_32 {dimension_numbers = #tpu.dot_dimension_numbers<[1], [0], [0], [1], [0, 0, 1, 1], [], []>} : vector<8x8xf32>, vector<8x8xf32>, vector<8x8xf32> -> vector<8x8xf32>
    %112 = vector.extract_strided_slice %93 {offsets = [0, 40], sizes = [8, 8], strides = [1, 1]} : vector<8x64xf32> to vector<8x8xf32>
    %113 = vector.extract_strided_slice %108 {offsets = [0, 8], sizes = [8, 8], strides = [1, 1]} : vector<8x32xf32> to vector<8x8xf32>
    %cst_33 = arith.constant dense<0.000000e+00> : vector<8x8xf32>
    %114 = tpu.matmul %112, %113, %cst_33 {dimension_numbers = #tpu.dot_dimension_numbers<[1], [0], [0], [1], [0, 0, 1, 1], [], []>} : vector<8x8xf32>, vector<8x8xf32>, vector<8x8xf32> -> vector<8x8xf32>
    %115 = vector.extract_strided_slice %93 {offsets = [0, 48], sizes = [8, 8], strides = [1, 1]} : vector<8x64xf32> to vector<8x8xf32>
    %116 = vector.extract_strided_slice %108 {offsets = [0, 16], sizes = [8, 8], strides = [1, 1]} : vector<8x32xf32> to vector<8x8xf32>
    %cst_34 = arith.constant dense<0.000000e+00> : vector<8x8xf32>
    %117 = tpu.matmul %115, %116, %cst_34 {dimension_numbers = #tpu.dot_dimension_numbers<[1], [0], [0], [1], [0, 0, 1, 1], [], []>} : vector<8x8xf32>, vector<8x8xf32>, vector<8x8xf32> -> vector<8x8xf32>
    %118 = vector.extract_strided_slice %93 {offsets = [0, 56], sizes = [8, 8], strides = [1, 1]} : vector<8x64xf32> to vector<8x8xf32>
    %119 = vector.extract_strided_slice %108 {offsets = [0, 24], sizes = [8, 8], strides = [1, 1]} : vector<8x32xf32> to vector<8x8xf32>
    %cst_35 = arith.constant dense<0.000000e+00> : vector<8x8xf32>
    %120 = tpu.matmul %118, %119, %cst_35 {dimension_numbers = #tpu.dot_dimension_numbers<[1], [0], [0], [1], [0, 0, 1, 1], [], []>} : vector<8x8xf32>, vector<8x8xf32>, vector<8x8xf32> -> vector<8x8xf32>
    %121 = tpu.concatenate %111, %114, %117, %120 in 1 : vector<8x8xf32>, vector<8x8xf32>, vector<8x8xf32>, vector<8x8xf32> -> vector<8x32xf32>
    %122 = tpu.concatenate %107, %121 in 0 : vector<8x32xf32>, vector<8x32xf32> -> vector<16x32xf32>
    %c0_36 = arith.constant 0 : index
    %c0_37 = arith.constant 0 : index
    %123 = vector.load %arg3[%c0_36, %c0_37] : memref<32x32xf32, #tpu.memory_space<vmem>>, vector<32x32xf32>
    %cst_38 = arith.constant dense<0.000000e+00> : vector<16x32xf32>
    %124 = tpu.matmul %122, %123, %cst_38 {dimension_numbers = #tpu.dot_dimension_numbers<[1], [0], [0], [1], [0, 0, 1, 1], [], []>} : vector<16x32xf32>, vector<32x32xf32>, vector<16x32xf32> -> vector<16x32xf32>
    %c0_39 = arith.constant 0 : index
    %c0_40 = arith.constant 0 : index
    %125 = vector.load %arg4[%c0_39, %c0_40] : memref<1x32xf32, #tpu.memory_space<vmem>>, vector<1x32xf32>
    %126 = vector.broadcast %125 : vector<1x32xf32> to vector<16x32xf32>
    %127 = arith.addf %124, %126 : vector<16x32xf32>
    %cst_41 = arith.constant 0.000000e+00 : f32
    %128 = vector.broadcast %cst_41 : f32 to vector<16x32xf32>
    %129 = arith.maximumf %127, %128 : vector<16x32xf32>
    %c0_42 = arith.constant 0 : index
    %c0_43 = arith.constant 0 : index
    %130 = vector.load %arg5[%c0_42, %c0_43] : memref<32x128xf32, #tpu.memory_space<vmem>>, vector<32x128xf32>
    %cst_44 = arith.constant dense<0.000000e+00> : vector<16x128xf32>
    %131 = tpu.matmul %129, %130, %cst_44 {dimension_numbers = #tpu.dot_dimension_numbers<[1], [0], [0], [1], [0, 0, 1, 1], [], []>} : vector<16x32xf32>, vector<32x128xf32>, vector<16x128xf32> -> vector<16x128xf32>
    %c0_45 = arith.constant 0 : index
    %c0_46 = arith.constant 0 : index
    %132 = vector.load %arg6[%c0_45, %c0_46] : memref<1x128xf32, #tpu.memory_space<vmem>>, vector<1x128xf32>
    %133 = vector.broadcast %132 : vector<1x128xf32> to vector<16x128xf32>
    %134 = arith.addf %131, %133 : vector<16x128xf32>
    %c0_47 = arith.constant 0 : index
    %c0_48 = arith.constant 0 : index
    %135 = vector.load %arg7[%c0_47, %c0_48] : memref<16x128xf32, #tpu.memory_space<vmem>>, vector<16x128xf32>
    tpu.vector_store %arg7[%c0_47, %c0_48], %134 {strides = array<i32>} : memref<16x128xf32, #tpu.memory_space<vmem>>, vector<16x128xf32>,
    return
  }
}

</mosaic_0001>

<llo_original>
// kernel: tpu_custom_call.1
$region0: #{tpu_custom_call.1}
  #allocation0 [shape = 'u32[]', space=smem, size = 0x4, offset = 0x4, fixed_abs, tag = 'smem constant byte address 0x4 - core index']
  #allocation1 [shape = 'u32[144,128]{1,0:T(1,128)}', space=vmem, size = 0x12000, scoped, tag = 'internal scratch']
  %s0 = inlined_call_operand.vmem [shape: s32[16,1], index: 0, kind: input, shape index: {}]
  %s1 = inlined_call_operand.vmem [shape: f32[128,32], index: 1, kind: input, shape index: {}]
  %s2 = inlined_call_operand.vmem [shape: f32[32,96], index: 2, kind: input, shape index: {}]
  %s3 = inlined_call_operand.vmem [shape: f32[32,32], index: 3, kind: input, shape index: {}]
  %s4 = inlined_call_operand.vmem [shape: f32[1,32], index: 4, kind: input, shape index: {}]
  %s5 = inlined_call_operand.vmem [shape: f32[32,128], index: 5, kind: input, shape index: {}]
  %s6 = inlined_call_operand.vmem [shape: f32[1,128], index: 6, kind: input, shape index: {}]
  %s7 = inlined_call_operand.hbm [shape: f32[16,128], index: 7, kind: output, shape index: {}]
  %s8 = sld [smem:[#allocation0]]
  $region38: #{tpu_custom_call.1} parent=0
    _
  %s10 = ssub.s32 1, %s8
  %s11 = scalar_select 0, %s10, %s8
  $region1: #{tpu_custom_call.1} parent=0
    #allocation2 [shape = 'u8[8192]{0}', space=vmem, size = 0x2000, scoped, tag = 'output window, operand 0, single buffered']
    #allocation3 [shape = 's32[1]{0}', space=sflag, size = 0x4, scoped, tag = 'scoped memory for tpu_custom_call.1']
    %12 = vsyncpa [#allocation3], 0
    // Predicated region
    $region2: #{tpu_custom_call.1} parent=1 // pred_check
      _
    $region3: #{tpu_custom_call.1} parent=1 // pred_check_branch
      %14 = sbr.rel (0) target = $region5
    $region4: #{tpu_custom_call.1} parent=1 // pred_region
      _
    $region5: #{tpu_custom_call.1} parent=1 // pred_fallthru
      _
    // Predicated region
    $region6: #{tpu_custom_call.1} parent=1 // pred_check
      _
    $region7: #{tpu_custom_call.1} parent=1 // pred_check_branch
      %16 = sbr.rel (0) target = $region9
    $region8: #{tpu_custom_call.1} parent=1 // pred_region
      _
    $region9: #{tpu_custom_call.1} parent=1 // pred_fallthru
      _
    // Predicated region
    $region10: #{tpu_custom_call.1} parent=1 // pred_check
      _
    $region11: #{tpu_custom_call.1} parent=1 // pred_check_branch
      %18 = sbr.rel (0) target = $region13
    $region12: #{tpu_custom_call.1} parent=1 // pred_region
      _
    $region13: #{tpu_custom_call.1} parent=1 // pred_fallthru
      _
    // Predicated region
    $region14: #{tpu_custom_call.1} parent=1 // pred_check
      _
    $region15: #{tpu_custom_call.1} parent=1 // pred_check_branch
      %20 = sbr.rel (0) target = $region17
    $region16: #{tpu_custom_call.1} parent=1 // pred_region
      _
    $region17: #{tpu_custom_call.1} parent=1 // pred_fallthru
      _
    // Predicated region
    $region18: #{tpu_custom_call.1} parent=1 // pred_check
      _
    $region19: #{tpu_custom_call.1} parent=1 // pred_check_branch
      %22 = sbr.rel (0) target = $region21
    $region20: #{tpu_custom_call.1} parent=1 // pred_region
      _
    $region21: #{tpu_custom_call.1} parent=1 // pred_fallthru
      _
    // Predicated region
    $region22: #{tpu_custom_call.1} parent=1 // pred_check
      _
    $region23: #{tpu_custom_call.1} parent=1 // pred_check_branch
      %24 = sbr.rel (0) target = $region25
    $region24: #{tpu_custom_call.1} parent=1 // pred_region
      _
    $region25: #{tpu_custom_call.1} parent=1 // pred_fallthru
      _
    // Predicated region
    $region26: #{tpu_custom_call.1} parent=1 // pred_check
      _
    $region27: #{tpu_custom_call.1} parent=1 // pred_check_branch
      %26 = sbr.rel (0) target = $region29
    $region28: #{tpu_custom_call.1} parent=1 // pred_region
      _
    $region29: #{tpu_custom_call.1} parent=1 // pred_fallthru
      _
    %v27 = vlaneseq
    %v28 = vand.u32 %v27, 127
    %v29 = vlaneseq
    %v30 = vshrl.u32 %v29, 7
    %v31 = vadd.s32 %v30, 8
    %v32 = vld [vmem:[%s0] sm:$0xff]
    %v33 = vld [vmem:[%s0 + $0x8] sm:$0xff]
    %34 = vset.pattern.permute.xlu0 0
    %35 = vperm.xlu0 %34, %v32
    %v36 = vpop.permute.xlu0 %35
    %37 = vset.pattern.permute.xlu0 0
    %38 = vperm.xlu0 %37, %v33
    %v39 = vpop.permute.xlu0 %38
    %vm40 = vcmp.eq.s32.totalorder %v28, %v36
    %vm41 = vcmp.eq.s32.totalorder %v28, %v39
    %vm42 = vcmp.lt.s32.totalorder %v30, 0
    %v43 = vsub.s32 0, %v30
    %v44 = vsel %vm42, %v43, %v30
    %v45 = vshrl.u32 %v44, 3
    %v46 = vand.u32 %v44, 7
    %v47 = vsub.s32 0, %v46
    %v48 = vsel %vm42, %v47, %v46
    %vm49 = vcmp.lt.s32.totalorder %v31, 0
    %v50 = vsub.s32 0, %v31
    %v51 = vsel %vm49, %v50, %v31
    %v52 = vshrl.u32 %v51, 3
    %v53 = vand.u32 %v51, 7
    %v54 = vsub.s32 0, %v53
    %v55 = vsel %vm49, %v54, %v53
    %vm56 = vcmp.ne.s32.totalorder %v48, 0
    %vm57 = vcmp.ne.s32.totalorder %v55, 0
    %vm58 = vcmp.lt.s32.totalorder %v48, 0
    %vm59 = vcmp.lt.s32.totalorder %v55, 0
    %vm60 = vmand %vm58, %vm56
    %vm61 = vmand %vm59, %vm57
    %v62 = vadd.s32 %v48, 8
    %v63 = vadd.s32 %v55, 8
    %v64 = vsel %vm60, %v62, %v48
    %v65 = vsel %vm61, %v63, %v55
    %v66 = vadd.s32 %v64, 65
    %v67 = vadd.s32 %v65, 65
    %vm68 = vcmp.eq.s32.totalorder %v28, %v66
    %vm69 = vcmp.eq.s32.totalorder %v28, %v67
    %vm70 = vmor %vm40, %vm68
    %vm71 = vmor %vm41, %vm69
    %v72 = vsel %vm70, 1, 0
    %v73 = vsel %vm71, 1, 0
    %v74 = vcvt.s32.f32 %v72
    %v75 = vcvt.s32.f32 %v73
    %v76 = vld [vmem:[%s1] sm:$0xff]
    %v77 = vld [vmem:[%s1 + $0x8] sm:$0xff]
    %v78 = vld [vmem:[%s1 + $0x10] sm:$0xff]
    %v79 = vld [vmem:[%s1 + $0x18] sm:$0xff]
    %v80 = vld [vmem:[%s1 + $0x20] sm:$0xff]
    %v81 = vld [vmem:[%s1 + $0x28] sm:$0xff]
    %v82 = vld [vmem:[%s1 + $0x30] sm:$0xff]
    %v83 = vld [vmem:[%s1 + $0x38] sm:$0xff]
    %v84 = vld [vmem:[%s1 + $0x40] sm:$0xff]
    %v85 = vld [vmem:[%s1 + $0x48] sm:$0xff]
    %v86 = vld [vmem:[%s1 + $0x50] sm:$0xff]
    %v87 = vld [vmem:[%s1 + $0x58] sm:$0xff]
    %v88 = vld [vmem:[%s1 + $0x60] sm:$0xff]
    %v89 = vld [vmem:[%s1 + $0x68] sm:$0xff]
    %v90 = vld [vmem:[%s1 + $0x70] sm:$0xff]
    %v91 = vld [vmem:[%s1 + $0x78] sm:$0xff]
    %92 = vmatprep.subr.mxu0 0.0
    %93 = vmatpush1.msra.mxu0 %v91
    %94 = vmatprep.subr.mxu0 0.0
    %95 = vmatpush1.msra.mxu0 %v90
    %96 = vmatprep.subr.mxu0 0.0
    %97 = vmatpush1.msra.mxu0 %v89
    %98 = vmatprep.subr.mxu0 0.0
    %99 = vmatpush1.msra.mxu0 %v88
    %100 = vmatprep.subr.mxu0 0.0
    %101 = vmatpush1.msra.mxu0 %v87
    %102 = vmatprep.subr.mxu0 0.0
    %103 = vmatpush1.msra.mxu0 %v86
    %104 = vmatprep.subr.mxu0 0.0
    %105 = vmatpush1.msra.mxu0 %v85
    %106 = vmatprep.subr.mxu0 0.0
    %107 = vmatpush1.msra.mxu0 %v84
    %108 = vmatprep.subr.mxu0 0.0
    %109 = vmatpush1.msra.mxu0 %v83
    %110 = vmatprep.subr.mxu0 0.0
    %111 = vmatpush1.msra.mxu0 %v82
    %112 = vmatprep.subr.mxu0 0.0
    %113 = vmatpush1.msra.mxu0 %v81
    %114 = vmatprep.subr.mxu0 0.0
    %115 = vmatpush1.msra.mxu0 %v80
    %116 = vmatprep.subr.mxu0 0.0
    %117 = vmatpush1.msra.mxu0 %v79
    %118 = vmatprep.subr.mxu0 0.0
    %119 = vmatpush1.msra.mxu0 %v78
    %120 = vmatprep.subr.mxu0 0.0
    %121 = vmatpush1.msra.mxu0 %v77
    %122 = vmatprep.subr.mxu0 0.0
    %123 = vmatpush1.msra.mxu0 %v76
    %124 = vmatprep.subr.mxu0 0.0
    %125 = vmatpush2.msra.mxu0 0.0
    %126 = vmatprep.subr.mxu0 0.0
    %127 = vmatpush2.msra.mxu0 0.0
    %128 = vmatprep.subr.mxu0 0.0
    %129 = vmatpush2.msra.mxu0 0.0
    %130 = vmatprep.subr.mxu0 0.0
    %131 = vmatpush2.msra.mxu0 0.0
    %132 = vmatprep.subr.mxu0 0.0
    %133 = vmatpush2.msra.mxu0 0.0
    %134 = vmatprep.subr.mxu0 0.0
    %135 = vmatpush2.msra.mxu0 0.0
    %136 = vmatprep.subr.mxu0 0.0
    %137 = vmatpush2.msra.mxu0 0.0
    %138 = vmatprep.subr.mxu0 0.0
    %139 = vmatpush2.msra.mxu0 0.0
    %140 = vmatprep.subr.mxu0 0.0
    %141 = vmatpush2.msra.mxu0 0.0
    %142 = vmatprep.subr.mxu0 0.0
    %143 = vmatpush2.msra.mxu0 0.0
    %144 = vmatprep.subr.mxu0 0.0
    %145 = vmatpush2.msra.mxu0 0.0
    %146 = vmatprep.subr.mxu0 0.0
    %147 = vmatpush2.msra.mxu0 0.0
    %148 = vmatprep.subr.mxu0 0.0
    %149 = vmatpush2.msra.mxu0 0.0
    %150 = vmatprep.subr.mxu0 0.0
    %151 = vmatpush2.msra.mxu0 0.0
    %152 = vmatprep.subr.mxu0 0.0
    %153 = vmatpush2.msra.mxu0 0.0
    %154 = vmatprep.subr.mxu0 0.0
    %155 = vmatpush2.msra.mxu0 0.0
    %156 = vmatprep.mubr.f32.mxu0 0.0
    %157 = vmatmul.mubr.f32.gmra.mxu0 %v74
    %v158 = vpop.f32.mrf.mxu0
    %v159 = vadd.f32 0.0, %v158
    %v160 = vpop.f32.mrf.mxu0
    %161 = vmatprep.mubr.f32.mxu0 0.0
    %162 = vmatmul.mubr.f32.gmra.mxu0 %v75
    %v163 = vpop.f32.mrf.mxu0
    %v164 = vadd.f32 0.0, %v163
    %v165 = vpop.f32.mrf.mxu0
    %166 = vdwg.mxu0
    %v167 = vld [vmem:[%s2] sm:$0xff]
    %v168 = vld [vmem:[%s2 + $0x8] sm:$0xff]
    %v169 = vld [vmem:[%s2 + $0x10] sm:$0xff]
    %v170 = vld [vmem:[%s2 + $0x18] sm:$0xff]
    %vm171 = vcmask 261120
    %v173 = vsel %vm171, %v159, 0
    %v176 = vsel %vm171, %v164, 0
    %178 = vmatprep.subr.mxu0 0.0
    %179 = vmatpush1.msra.mxu0 0.0
    %180 = vmatprep.subr.mxu0 0.0
    %181 = vmatpush1.msra.mxu0 0.0
    %182 = vmatprep.subr.mxu0 0.0
    %183 = vmatpush1.msra.mxu0 0.0
    %184 = vmatprep.subr.mxu0 0.0
    %185 = vmatpush1.msra.mxu0 0.0
    %186 = vmatprep.subr.mxu0 0.0
    %187 = vmatpush1.msra.mxu0 0.0
    %188 = vmatprep.subr.mxu0 0.0
    %189 = vmatpush1.msra.mxu0 0.0
    %190 = vmatprep.subr.mxu0 0.0
    %191 = vmatpush1.msra.mxu0 0.0
    %192 = vmatprep.subr.mxu0 0.0
    %193 = vmatpush1.msra.mxu0 0.0
    %194 = vmatprep.subr.mxu0 0.0
    %195 = vmatpush1.msra.mxu0 0.0
    %196 = vmatprep.subr.mxu0 0.0
    %197 = vmatpush1.msra.mxu0 0.0
    %198 = vmatprep.subr.mxu0 0.0
    %199 = vmatpush1.msra.mxu0 0.0
    %200 = vmatprep.subr.mxu0 0.0
    %201 = vmatpush1.msra.mxu0 0.0
    %202 = vmatprep.subr.mxu0 0.0
    %203 = vmatpush1.msra.mxu0 %v170
    %204 = vmatprep.subr.mxu0 0.0
    %205 = vmatpush1.msra.mxu0 %v169
    %206 = vmatprep.subr.mxu0 0.0
    %207 = vmatpush1.msra.mxu0 %v168
    %208 = vmatprep.subr.mxu0 0.0
    %209 = vmatpush1.msra.mxu0 %v167
    %210 = vmatprep.subr.mxu0 0.0
    %211 = vmatpush2.msra.mxu0 0.0
    %212 = vmatprep.subr.mxu0 0.0
    %213 = vmatpush2.msra.mxu0 0.0
    %214 = vmatprep.subr.mxu0 0.0
    %215 = vmatpush2.msra.mxu0 0.0
    %216 = vmatprep.subr.mxu0 0.0
    %217 = vmatpush2.msra.mxu0 0.0
    %218 = vmatprep.subr.mxu0 0.0
    %219 = vmatpush2.msra.mxu0 0.0
    %220 = vmatprep.subr.mxu0 0.0
    %221 = vmatpush2.msra.mxu0 0.0
    %222 = vmatprep.subr.mxu0 0.0
    %223 = vmatpush2.msra.mxu0 0.0
    %224 = vmatprep.subr.mxu0 0.0
    %225 = vmatpush2.msra.mxu0 0.0
    %226 = vmatprep.subr.mxu0 0.0
    %227 = vmatpush2.msra.mxu0 0.0
    %228 = vmatprep.subr.mxu0 0.0
    %229 = vmatpush2.msra.mxu0 0.0
    %230 = vmatprep.subr.mxu0 0.0
    %231 = vmatpush2.msra.mxu0 0.0
    %232 = vmatprep.subr.mxu0 0.0
    %233 = vmatpush2.msra.mxu0 0.0
    %234 = vmatprep.subr.mxu0 0.0
    %235 = vmatpush2.msra.mxu0 0.0
    %236 = vmatprep.subr.mxu0 0.0
    %237 = vmatpush2.msra.mxu0 0.0
    %238 = vmatprep.subr.mxu0 0.0
    %239 = vmatpush2.msra.mxu0 0.0
    %240 = vmatprep.subr.mxu0 0.0
    %241 = vmatpush2.msra.mxu0 0.0
    %242 = vmatprep.mubr.f32.mxu0 0.0
    %243 = vmatmul.mubr.f32.gmra.mxu0 %v173
    %v244 = vpop.f32.mrf.mxu0
    %v245 = vadd.f32 0.0, %v244
    %v246 = vpop.f32.mrf.mxu0
    %247 = vmatprep.mubr.f32.mxu0 0.0
    %248 = vmatmul.mubr.f32.gmra.mxu0 %v176
    %v249 = vpop.f32.mrf.mxu0
    %v250 = vadd.f32 0.0, %v249
    %v251 = vpop.f32.mrf.mxu0
    %252 = vdwg.mxu0
    %254 = vrot.lane.b32.xlu0 %v245, 96
    %v255 = vpop.permute.xlu0 %254
    %vm256 = vcmask 64512
    %v257 = vsel %vm256, %v245, 0
    %v259 = vsel %vm256, %v255, 0
    %261 = vmatprep.subr.mxu0 0.0
    %262 = vmatpush1.xpose.msra.mxu0 0.0
    %263 = vmatprep.subr.mxu0 0.0
    %264 = vmatpush1.xpose.msra.mxu0 0.0
    %265 = vmatprep.subr.mxu0 0.0
    %266 = vmatpush1.xpose.msra.mxu0 0.0
    %267 = vmatprep.subr.mxu0 0.0
    %268 = vmatpush1.xpose.msra.mxu0 0.0
    %269 = vmatprep.subr.mxu0 0.0
    %270 = vmatpush1.xpose.msra.mxu0 0.0
    %271 = vmatprep.subr.mxu0 0.0
    %272 = vmatpush1.xpose.msra.mxu0 0.0
    %273 = vmatprep.subr.mxu0 0.0
    %274 = vmatpush1.xpose.msra.mxu0 0.0
    %275 = vmatprep.subr.mxu0 0.0
    %276 = vmatpush1.xpose.msra.mxu0 0.0
    %277 = vmatprep.subr.mxu0 0.0
    %278 = vmatpush1.xpose.msra.mxu0 0.0
    %279 = vmatprep.subr.mxu0 0.0
    %280 = vmatpush1.xpose.msra.mxu0 0.0
    %281 = vmatprep.subr.mxu0 0.0
    %282 = vmatpush1.xpose.msra.mxu0 0.0
    %283 = vmatprep.subr.mxu0 0.0
    %284 = vmatpush1.xpose.msra.mxu0 0.0
    %285 = vmatprep.subr.mxu0 0.0
    %286 = vmatpush1.xpose.msra.mxu0 0.0
    %287 = vmatprep.subr.mxu0 0.0
    %288 = vmatpush1.xpose.msra.mxu0 0.0
    %289 = vmatprep.subr.mxu0 0.0
    %290 = vmatpush1.xpose.msra.mxu0 0.0
    %291 = vmatprep.subr.mxu0 0.0
    %292 = vmatpush1.xpose.msra.mxu0 %v259
    %293 = vmatprep.subr.mxu0 0.0
    %294 = vmatpush2.xpose.msra.mxu0 0.0
    %295 = vmatprep.subr.mxu0 0.0
    %296 = vmatpush2.xpose.msra.mxu0 0.0
    %297 = vmatprep.subr.mxu0 0.0
    %298 = vmatpush2.xpose.msra.mxu0 0.0
    %299 = vmatprep.subr.mxu0 0.0
    %300 = vmatpush2.xpose.msra.mxu0 0.0
    %301 = vmatprep.subr.mxu0 0.0
    %302 = vmatpush2.xpose.msra.mxu0 0.0
    %303 = vmatprep.subr.mxu0 0.0
    %304 = vmatpush2.xpose.msra.mxu0 0.0
    %305 = vmatprep.subr.mxu0 0.0
    %306 = vmatpush2.xpose.msra.mxu0 0.0
    %307 = vmatprep.subr.mxu0 0.0
    %308 = vmatpush2.xpose.msra.mxu0 0.0
    %309 = vmatprep.subr.mxu0 0.0
    %310 = vmatpush2.xpose.msra.mxu0 0.0
    %311 = vmatprep.subr.mxu0 0.0
    %312 = vmatpush2.xpose.msra.mxu0 0.0
    %313 = vmatprep.subr.mxu0 0.0
    %314 = vmatpush2.xpose.msra.mxu0 0.0
    %315 = vmatprep.subr.mxu0 0.0
    %316 = vmatpush2.xpose.msra.mxu0 0.0
    %317 = vmatprep.subr.mxu0 0.0
    %318 = vmatpush2.xpose.msra.mxu0 0.0
    %319 = vmatprep.subr.mxu0 0.0
    %320 = vmatpush2.xpose.msra.mxu0 0.0
    %321 = vmatprep.subr.mxu0 0.0
    %322 = vmatpush2.xpose.msra.mxu0 0.0
    %323 = vmatprep.subr.mxu0 0.0
    %324 = vmatpush2.xpose.msra.mxu0 0.0
    %325 = vmatprep.mubr.f32.mxu0 0.0
    %326 = vmatmul.mubr.f32.gmra.mxu0 %v257
    %v327 = vpop.f32.mrf.mxu0
    %v328 = vadd.f32 0.0, %v327
    %v329 = vpop.f32.mrf.mxu0
    %330 = vdwg.mxu0
    %331 = vrot.lane.b32.xlu0 %v245, 120
    %v332 = vpop.permute.xlu0 %331
    %333 = vrot.lane.b32.xlu0 %v245, 88
    %v334 = vpop.permute.xlu0 %333
    %v335 = vsel %vm256, %v332, 0
    %v337 = vsel %vm256, %v334, 0
    %339 = vmatprep.subr.mxu0 0.0
    %340 = vmatpush1.xpose.msra.mxu0 0.0
    %341 = vmatprep.subr.mxu0 0.0
    %342 = vmatpush1.xpose.msra.mxu0 0.0
    %343 = vmatprep.subr.mxu0 0.0
    %344 = vmatpush1.xpose.msra.mxu0 0.0
    %345 = vmatprep.subr.mxu0 0.0
    %346 = vmatpush1.xpose.msra.mxu0 0.0
    %347 = vmatprep.subr.mxu0 0.0
    %348 = vmatpush1.xpose.msra.mxu0 0.0
    %349 = vmatprep.subr.mxu0 0.0
    %350 = vmatpush1.xpose.msra.mxu0 0.0
    %351 = vmatprep.subr.mxu0 0.0
    %352 = vmatpush1.xpose.msra.mxu0 0.0
    %353 = vmatprep.subr.mxu0 0.0
    %354 = vmatpush1.xpose.msra.mxu0 0.0
    %355 = vmatprep.subr.mxu0 0.0
    %356 = vmatpush1.xpose.msra.mxu0 0.0
    %357 = vmatprep.subr.mxu0 0.0
    %358 = vmatpush1.xpose.msra.mxu0 0.0
    %359 = vmatprep.subr.mxu0 0.0
    %360 = vmatpush1.xpose.msra.mxu0 0.0
    %361 = vmatprep.subr.mxu0 0.0
    %362 = vmatpush1.xpose.msra.mxu0 0.0
    %363 = vmatprep.subr.mxu0 0.0
    %364 = vmatpush1.xpose.msra.mxu0 0.0
    %365 = vmatprep.subr.mxu0 0.0
    %366 = vmatpush1.xpose.msra.mxu0 0.0
    %367 = vmatprep.subr.mxu0 0.0
    %368 = vmatpush1.xpose.msra.mxu0 0.0
    %369 = vmatprep.subr.mxu0 0.0
    %370 = vmatpush1.xpose.msra.mxu0 %v337
    %371 = vmatprep.subr.mxu0 0.0
    %372 = vmatpush2.xpose.msra.mxu0 0.0
    %373 = vmatprep.subr.mxu0 0.0
    %374 = vmatpush2.xpose.msra.mxu0 0.0
    %375 = vmatprep.subr.mxu0 0.0
    %376 = vmatpush2.xpose.msra.mxu0 0.0
    %377 = vmatprep.subr.mxu0 0.0
    %378 = vmatpush2.xpose.msra.mxu0 0.0
    %379 = vmatprep.subr.mxu0 0.0
    %380 = vmatpush2.xpose.msra.mxu0 0.0
    %381 = vmatprep.subr.mxu0 0.0
    %382 = vmatpush2.xpose.msra.mxu0 0.0
    %383 = vmatprep.subr.mxu0 0.0
    %384 = vmatpush2.xpose.msra.mxu0 0.0
    %385 = vmatprep.subr.mxu0 0.0
    %386 = vmatpush2.xpose.msra.mxu0 0.0
    %387 = vmatprep.subr.mxu0 0.0
    %388 = vmatpush2.xpose.msra.mxu0 0.0
    %389 = vmatprep.subr.mxu0 0.0
    %390 = vmatpush2.xpose.msra.mxu0 0.0
    %391 = vmatprep.subr.mxu0 0.0
    %392 = vmatpush2.xpose.msra.mxu0 0.0
    %393 = vmatprep.subr.mxu0 0.0
    %394 = vmatpush2.xpose.msra.mxu0 0.0
    %395 = vmatprep.subr.mxu0 0.0
    %396 = vmatpush2.xpose.msra.mxu0 0.0
    %397 = vmatprep.subr.mxu0 0.0
    %398 = vmatpush2.xpose.msra.mxu0 0.0
    %399 = vmatprep.subr.mxu0 0.0
    %400 = vmatpush2.xpose.msra.mxu0 0.0
    %401 = vmatprep.subr.mxu0 0.0
    %402 = vmatpush2.xpose.msra.mxu0 0.0
    %403 = vmatprep.mubr.f32.mxu0 0.0
    %404 = vmatmul.mubr.f32.gmra.mxu0 %v335
    %v405 = vpop.f32.mrf.mxu0
    %v406 = vadd.f32 0.0, %v405
    %v407 = vpop.f32.mrf.mxu0
    %408 = vdwg.mxu0
    %409 = vrot.lane.b32.xlu0 %v245, 112
    %v410 = vpop.permute.xlu0 %409
    %411 = vrot.lane.b32.xlu0 %v245, 80
    %v412 = vpop.permute.xlu0 %411
    %v413 = vsel %vm256, %v410, 0
    %v415 = vsel %vm256, %v412, 0
    %417 = vmatprep.subr.mxu0 0.0
    %418 = vmatpush1.xpose.msra.mxu0 0.0
    %419 = vmatprep.subr.mxu0 0.0
    %420 = vmatpush1.xpose.msra.mxu0 0.0
    %421 = vmatprep.subr.mxu0 0.0
    %422 = vmatpush1.xpose.msra.mxu0 0.0
    %423 = vmatprep.subr.mxu0 0.0
    %424 = vmatpush1.xpose.msra.mxu0 0.0
    %425 = vmatprep.subr.mxu0 0.0
    %426 = vmatpush1.xpose.msra.mxu0 0.0
    %427 = vmatprep.subr.mxu0 0.0
    %428 = vmatpush1.xpose.msra.mxu0 0.0
    %429 = vmatprep.subr.mxu0 0.0
    %430 = vmatpush1.xpose.msra.mxu0 0.0
    %431 = vmatprep.subr.mxu0 0.0
    %432 = vmatpush1.xpose.msra.mxu0 0.0
    %433 = vmatprep.subr.mxu0 0.0
    %434 = vmatpush1.xpose.msra.mxu0 0.0
    %435 = vmatprep.subr.mxu0 0.0
    %436 = vmatpush1.xpose.msra.mxu0 0.0
    %437 = vmatprep.subr.mxu0 0.0
    %438 = vmatpush1.xpose.msra.mxu0 0.0
    %439 = vmatprep.subr.mxu0 0.0
    %440 = vmatpush1.xpose.msra.mxu0 0.0
    %441 = vmatprep.subr.mxu0 0.0
    %442 = vmatpush1.xpose.msra.mxu0 0.0
    %443 = vmatprep.subr.mxu0 0.0
    %444 = vmatpush1.xpose.msra.mxu0 0.0
    %445 = vmatprep.subr.mxu0 0.0
    %446 = vmatpush1.xpose.msra.mxu0 0.0
    %447 = vmatprep.subr.mxu0 0.0
    %448 = vmatpush1.xpose.msra.mxu0 %v415
    %449 = vmatprep.subr.mxu0 0.0
    %450 = vmatpush2.xpose.msra.mxu0 0.0
    %451 = vmatprep.subr.mxu0 0.0
    %452 = vmatpush2.xpose.msra.mxu0 0.0
    %453 = vmatprep.subr.mxu0 0.0
    %454 = vmatpush2.xpose.msra.mxu0 0.0
    %455 = vmatprep.subr.mxu0 0.0
    %456 = vmatpush2.xpose.msra.mxu0 0.0
    %457 = vmatprep.subr.mxu0 0.0
    %458 = vmatpush2.xpose.msra.mxu0 0.0
    %459 = vmatprep.subr.mxu0 0.0
    %460 = vmatpush2.xpose.msra.mxu0 0.0
    %461 = vmatprep.subr.mxu0 0.0
    %462 = vmatpush2.xpose.msra.mxu0 0.0
    %463 = vmatprep.subr.mxu0 0.0
    %464 = vmatpush2.xpose.msra.mxu0 0.0
    %465 = vmatprep.subr.mxu0 0.0
    %466 = vmatpush2.xpose.msra.mxu0 0.0
    %467 = vmatprep.subr.mxu0 0.0
    %468 = vmatpush2.xpose.msra.mxu0 0.0
    %469 = vmatprep.subr.mxu0 0.0
    %470 = vmatpush2.xpose.msra.mxu0 0.0
    %471 = vmatprep.subr.mxu0 0.0
    %472 = vmatpush2.xpose.msra.mxu0 0.0
    %473 = vmatprep.subr.mxu0 0.0
    %474 = vmatpush2.xpose.msra.mxu0 0.0
    %475 = vmatprep.subr.mxu0 0.0
    %476 = vmatpush2.xpose.msra.mxu0 0.0
    %477 = vmatprep.subr.mxu0 0.0
    %478 = vmatpush2.xpose.msra.mxu0 0.0
    %479 = vmatprep.subr.mxu0 0.0
    %480 = vmatpush2.xpose.msra.mxu0 0.0
    %481 = vmatprep.mubr.f32.mxu0 0.0
    %482 = vmatmul.mubr.f32.gmra.mxu0 %v413
    %v483 = vpop.f32.mrf.mxu0
    %v484 = vadd.f32 0.0, %v483
    %v485 = vpop.f32.mrf.mxu0
    %486 = vdwg.mxu0
    %487 = vrot.lane.b32.xlu0 %v245, 104
    %v488 = vpop.permute.xlu0 %487
    %489 = vrot.lane.b32.xlu0 %v245, 72
    %v490 = vpop.permute.xlu0 %489
    %v491 = vsel %vm256, %v488, 0
    %v493 = vsel %vm256, %v490, 0
    %495 = vmatprep.subr.mxu0 0.0
    %496 = vmatpush1.xpose.msra.mxu0 0.0
    %497 = vmatprep.subr.mxu0 0.0
    %498 = vmatpush1.xpose.msra.mxu0 0.0
    %499 = vmatprep.subr.mxu0 0.0
    %500 = vmatpush1.xpose.msra.mxu0 0.0
    %501 = vmatprep.subr.mxu0 0.0
    %502 = vmatpush1.xpose.msra.mxu0 0.0
    %503 = vmatprep.subr.mxu0 0.0
    %504 = vmatpush1.xpose.msra.mxu0 0.0
    %505 = vmatprep.subr.mxu0 0.0
    %506 = vmatpush1.xpose.msra.mxu0 0.0
    %507 = vmatprep.subr.mxu0 0.0
    %508 = vmatpush1.xpose.msra.mxu0 0.0
    %509 = vmatprep.subr.mxu0 0.0
    %510 = vmatpush1.xpose.msra.mxu0 0.0
    %511 = vmatprep.subr.mxu0 0.0
    %512 = vmatpush1.xpose.msra.mxu0 0.0
    %513 = vmatprep.subr.mxu0 0.0
    %514 = vmatpush1.xpose.msra.mxu0 0.0
    %515 = vmatprep.subr.mxu0 0.0
    %516 = vmatpush1.xpose.msra.mxu0 0.0
    %517 = vmatprep.subr.mxu0 0.0
    %518 = vmatpush1.xpose.msra.mxu0 0.0
    %519 = vmatprep.subr.mxu0 0.0
    %520 = vmatpush1.xpose.msra.mxu0 0.0
    %521 = vmatprep.subr.mxu0 0.0
    %522 = vmatpush1.xpose.msra.mxu0 0.0
    %523 = vmatprep.subr.mxu0 0.0
    %524 = vmatpush1.xpose.msra.mxu0 0.0
    %525 = vmatprep.subr.mxu0 0.0
    %526 = vmatpush1.xpose.msra.mxu0 %v493
    %527 = vmatprep.subr.mxu0 0.0
    %528 = vmatpush2.xpose.msra.mxu0 0.0
    %529 = vmatprep.subr.mxu0 0.0
    %530 = vmatpush2.xpose.msra.mxu0 0.0
    %531 = vmatprep.subr.mxu0 0.0
    %532 = vmatpush2.xpose.msra.mxu0 0.0
    %533 = vmatprep.subr.mxu0 0.0
    %534 = vmatpush2.xpose.msra.mxu0 0.0
    %535 = vmatprep.subr.mxu0 0.0
    %536 = vmatpush2.xpose.msra.mxu0 0.0
    %537 = vmatprep.subr.mxu0 0.0
    %538 = vmatpush2.xpose.msra.mxu0 0.0
    %539 = vmatprep.subr.mxu0 0.0
    %540 = vmatpush2.xpose.msra.mxu0 0.0
    %541 = vmatprep.subr.mxu0 0.0
    %542 = vmatpush2.xpose.msra.mxu0 0.0
    %543 = vmatprep.subr.mxu0 0.0
    %544 = vmatpush2.xpose.msra.mxu0 0.0
    %545 = vmatprep.subr.mxu0 0.0
    %546 = vmatpush2.xpose.msra.mxu0 0.0
    %547 = vmatprep.subr.mxu0 0.0
    %548 = vmatpush2.xpose.msra.mxu0 0.0
    %549 = vmatprep.subr.mxu0 0.0
    %550 = vmatpush2.xpose.msra.mxu0 0.0
    %551 = vmatprep.subr.mxu0 0.0
    %552 = vmatpush2.xpose.msra.mxu0 0.0
    %553 = vmatprep.subr.mxu0 0.0
    %554 = vmatpush2.xpose.msra.mxu0 0.0
    %555 = vmatprep.subr.mxu0 0.0
    %556 = vmatpush2.xpose.msra.mxu0 0.0
    %557 = vmatprep.subr.mxu0 0.0
    %558 = vmatpush2.xpose.msra.mxu0 0.0
    %559 = vmatprep.mubr.f32.mxu0 0.0
    %560 = vmatmul.mubr.f32.gmra.mxu0 %v491
    %v561 = vpop.f32.mrf.mxu0
    %v562 = vadd.f32 0.0, %v561
    %v563 = vpop.f32.mrf.mxu0
    %564 = vdwg.mxu0
    %566 = vrot.lane.b32.xlu0 %v250, 96
    %v567 = vpop.permute.xlu0 %566
    %v568 = vsel %vm256, %v250, 0
    %v570 = vsel %vm256, %v567, 0
    %572 = vmatprep.subr.mxu0 0.0
    %573 = vmatpush1.xpose.msra.mxu0 0.0
    %574 = vmatprep.subr.mxu0 0.0
    %575 = vmatpush1.xpose.msra.mxu0 0.0
    %576 = vmatprep.subr.mxu0 0.0
    %577 = vmatpush1.xpose.msra.mxu0 0.0
    %578 = vmatprep.subr.mxu0 0.0
    %579 = vmatpush1.xpose.msra.mxu0 0.0
    %580 = vmatprep.subr.mxu0 0.0
    %581 = vmatpush1.xpose.msra.mxu0 0.0
    %582 = vmatprep.subr.mxu0 0.0
    %583 = vmatpush1.xpose.msra.mxu0 0.0
    %584 = vmatprep.subr.mxu0 0.0
    %585 = vmatpush1.xpose.msra.mxu0 0.0
    %586 = vmatprep.subr.mxu0 0.0
    %587 = vmatpush1.xpose.msra.mxu0 0.0
    %588 = vmatprep.subr.mxu0 0.0
    %589 = vmatpush1.xpose.msra.mxu0 0.0
    %590 = vmatprep.subr.mxu0 0.0
    %591 = vmatpush1.xpose.msra.mxu0 0.0
    %592 = vmatprep.subr.mxu0 0.0
    %593 = vmatpush1.xpose.msra.mxu0 0.0
    %594 = vmatprep.subr.mxu0 0.0
    %595 = vmatpush1.xpose.msra.mxu0 0.0
    %596 = vmatprep.subr.mxu0 0.0
    %597 = vmatpush1.xpose.msra.mxu0 0.0
    %598 = vmatprep.subr.mxu0 0.0
    %599 = vmatpush1.xpose.msra.mxu0 0.0
    %600 = vmatprep.subr.mxu0 0.0
    %601 = vmatpush1.xpose.msra.mxu0 0.0
    %602 = vmatprep.subr.mxu0 0.0
    %603 = vmatpush1.xpose.msra.mxu0 %v570
    %604 = vmatprep.subr.mxu0 0.0
    %605 = vmatpush2.xpose.msra.mxu0 0.0
    %606 = vmatprep.subr.mxu0 0.0
    %607 = vmatpush2.xpose.msra.mxu0 0.0
    %608 = vmatprep.subr.mxu0 0.0
    %609 = vmatpush2.xpose.msra.mxu0 0.0
    %610 = vmatprep.subr.mxu0 0.0
    %611 = vmatpush2.xpose.msra.mxu0 0.0
    %612 = vmatprep.subr.mxu0 0.0
    %613 = vmatpush2.xpose.msra.mxu0 0.0
    %614 = vmatprep.subr.mxu0 0.0
    %615 = vmatpush2.xpose.msra.mxu0 0.0
    %616 = vmatprep.subr.mxu0 0.0
    %617 = vmatpush2.xpose.msra.mxu0 0.0
    %618 = vmatprep.subr.mxu0 0.0
    %619 = vmatpush2.xpose.msra.mxu0 0.0
    %620 = vmatprep.subr.mxu0 0.0
    %621 = vmatpush2.xpose.msra.mxu0 0.0
    %622 = vmatprep.subr.mxu0 0.0
    %623 = vmatpush2.xpose.msra.mxu0 0.0
    %624 = vmatprep.subr.mxu0 0.0
    %625 = vmatpush2.xpose.msra.mxu0 0.0
    %626 = vmatprep.subr.mxu0 0.0
    %627 = vmatpush2.xpose.msra.mxu0 0.0
    %628 = vmatprep.subr.mxu0 0.0
    %629 = vmatpush2.xpose.msra.mxu0 0.0
    %630 = vmatprep.subr.mxu0 0.0
    %631 = vmatpush2.xpose.msra.mxu0 0.0
    %632 = vmatprep.subr.mxu0 0.0
    %633 = vmatpush2.xpose.msra.mxu0 0.0
    %634 = vmatprep.subr.mxu0 0.0
    %635 = vmatpush2.xpose.msra.mxu0 0.0
    %636 = vmatprep.mubr.f32.mxu0 0.0
    %637 = vmatmul.mubr.f32.gmra.mxu0 %v568
    %v638 = vpop.f32.mrf.mxu0
    %v639 = vadd.f32 0.0, %v638
    %v640 = vpop.f32.mrf.mxu0
    %641 = vdwg.mxu0
    %642 = vrot.lane.b32.xlu0 %v250, 120
    %v643 = vpop.permute.xlu0 %642
    %644 = vrot.lane.b32.xlu0 %v250, 88
    %v645 = vpop.permute.xlu0 %644
    %v646 = vsel %vm256, %v643, 0
    %v648 = vsel %vm256, %v645, 0
    %650 = vmatprep.subr.mxu0 0.0
    %651 = vmatpush1.xpose.msra.mxu0 0.0
    %652 = vmatprep.subr.mxu0 0.0
    %653 = vmatpush1.xpose.msra.mxu0 0.0
    %654 = vmatprep.subr.mxu0 0.0
    %655 = vmatpush1.xpose.msra.mxu0 0.0
    %656 = vmatprep.subr.mxu0 0.0
    %657 = vmatpush1.xpose.msra.mxu0 0.0
    %658 = vmatprep.subr.mxu0 0.0
    %659 = vmatpush1.xpose.msra.mxu0 0.0
    %660 = vmatprep.subr.mxu0 0.0
    %661 = vmatpush1.xpose.msra.mxu0 0.0
    %662 = vmatprep.subr.mxu0 0.0
    %663 = vmatpush1.xpose.msra.mxu0 0.0
    %664 = vmatprep.subr.mxu0 0.0
    %665 = vmatpush1.xpose.msra.mxu0 0.0
    %666 = vmatprep.subr.mxu0 0.0
    %667 = vmatpush1.xpose.msra.mxu0 0.0
    %668 = vmatprep.subr.mxu0 0.0
    %669 = vmatpush1.xpose.msra.mxu0 0.0
    %670 = vmatprep.subr.mxu0 0.0
    %671 = vmatpush1.xpose.msra.mxu0 0.0
    %672 = vmatprep.subr.mxu0 0.0
    %673 = vmatpush1.xpose.msra.mxu0 0.0
    %674 = vmatprep.subr.mxu0 0.0
    %675 = vmatpush1.xpose.msra.mxu0 0.0
    %676 = vmatprep.subr.mxu0 0.0
    %677 = vmatpush1.xpose.msra.mxu0 0.0
    %678 = vmatprep.subr.mxu0 0.0
    %679 = vmatpush1.xpose.msra.mxu0 0.0
    %680 = vmatprep.subr.mxu0 0.0
    %681 = vmatpush1.xpose.msra.mxu0 %v648
    %682 = vmatprep.subr.mxu0 0.0
    %683 = vmatpush2.xpose.msra.mxu0 0.0
    %684 = vmatprep.subr.mxu0 0.0
    %685 = vmatpush2.xpose.msra.mxu0 0.0
    %686 = vmatprep.subr.mxu0 0.0
    %687 = vmatpush2.xpose.msra.mxu0 0.0
    %688 = vmatprep.subr.mxu0 0.0
    %689 = vmatpush2.xpose.msra.mxu0 0.0
    %690 = vmatprep.subr.mxu0 0.0
    %691 = vmatpush2.xpose.msra.mxu0 0.0
    %692 = vmatprep.subr.mxu0 0.0
    %693 = vmatpush2.xpose.msra.mxu0 0.0
    %694 = vmatprep.subr.mxu0 0.0
    %695 = vmatpush2.xpose.msra.mxu0 0.0
    %696 = vmatprep.subr.mxu0 0.0
    %697 = vmatpush2.xpose.msra.mxu0 0.0
    %698 = vmatprep.subr.mxu0 0.0
    %699 = vmatpush2.xpose.msra.mxu0 0.0
    %700 = vmatprep.subr.mxu0 0.0
    %701 = vmatpush2.xpose.msra.mxu0 0.0
    %702 = vmatprep.subr.mxu0 0.0
    %703 = vmatpush2.xpose.msra.mxu0 0.0
    %704 = vmatprep.subr.mxu0 0.0
    %705 = vmatpush2.xpose.msra.mxu0 0.0
    %706 = vmatprep.subr.mxu0 0.0
    %707 = vmatpush2.xpose.msra.mxu0 0.0
    %708 = vmatprep.subr.mxu0 0.0
    %709 = vmatpush2.xpose.msra.mxu0 0.0
    %710 = vmatprep.subr.mxu0 0.0
    %711 = vmatpush2.xpose.msra.mxu0 0.0
    %712 = vmatprep.subr.mxu0 0.0
    %713 = vmatpush2.xpose.msra.mxu0 0.0
    %714 = vmatprep.mubr.f32.mxu0 0.0
    %715 = vmatmul.mubr.f32.gmra.mxu0 %v646
    %v716 = vpop.f32.mrf.mxu0
    %v717 = vadd.f32 0.0, %v716
    %v718 = vpop.f32.mrf.mxu0
    %719 = vdwg.mxu0
    %720 = vrot.lane.b32.xlu0 %v250, 112
    %v721 = vpop.permute.xlu0 %720
    %722 = vrot.lane.b32.xlu0 %v250, 80
    %v723 = vpop.permute.xlu0 %722
    %v724 = vsel %vm256, %v721, 0
    %v726 = vsel %vm256, %v723, 0
    %728 = vmatprep.subr.mxu0 0.0
    %729 = vmatpush1.xpose.msra.mxu0 0.0
    %730 = vmatprep.subr.mxu0 0.0
    %731 = vmatpush1.xpose.msra.mxu0 0.0
    %732 = vmatprep.subr.mxu0 0.0
    %733 = vmatpush1.xpose.msra.mxu0 0.0
    %734 = vmatprep.subr.mxu0 0.0
    %735 = vmatpush1.xpose.msra.mxu0 0.0
    %736 = vmatprep.subr.mxu0 0.0
    %737 = vmatpush1.xpose.msra.mxu0 0.0
    %738 = vmatprep.subr.mxu0 0.0
    %739 = vmatpush1.xpose.msra.mxu0 0.0
    %740 = vmatprep.subr.mxu0 0.0
    %741 = vmatpush1.xpose.msra.mxu0 0.0
    %742 = vmatprep.subr.mxu0 0.0
    %743 = vmatpush1.xpose.msra.mxu0 0.0
    %744 = vmatprep.subr.mxu0 0.0
    %745 = vmatpush1.xpose.msra.mxu0 0.0
    %746 = vmatprep.subr.mxu0 0.0
    %747 = vmatpush1.xpose.msra.mxu0 0.0
    %748 = vmatprep.subr.mxu0 0.0
    %749 = vmatpush1.xpose.msra.mxu0 0.0
    %750 = vmatprep.subr.mxu0 0.0
    %751 = vmatpush1.xpose.msra.mxu0 0.0
    %752 = vmatprep.subr.mxu0 0.0
    %753 = vmatpush1.xpose.msra.mxu0 0.0
    %754 = vmatprep.subr.mxu0 0.0
    %755 = vmatpush1.xpose.msra.mxu0 0.0
    %756 = vmatprep.subr.mxu0 0.0
    %757 = vmatpush1.xpose.msra.mxu0 0.0
    %758 = vmatprep.subr.mxu0 0.0
    %759 = vmatpush1.xpose.msra.mxu0 %v726
    %760 = vmatprep.subr.mxu0 0.0
    %761 = vmatpush2.xpose.msra.mxu0 0.0
    %762 = vmatprep.subr.mxu0 0.0
    %763 = vmatpush2.xpose.msra.mxu0 0.0
    %764 = vmatprep.subr.mxu0 0.0
    %765 = vmatpush2.xpose.msra.mxu0 0.0
    %766 = vmatprep.subr.mxu0 0.0
    %767 = vmatpush2.xpose.msra.mxu0 0.0
    %768 = vmatprep.subr.mxu0 0.0
    %769 = vmatpush2.xpose.msra.mxu0 0.0
    %770 = vmatprep.subr.mxu0 0.0
    %771 = vmatpush2.xpose.msra.mxu0 0.0
    %772 = vmatprep.subr.mxu0 0.0
    %773 = vmatpush2.xpose.msra.mxu0 0.0
    %774 = vmatprep.subr.mxu0 0.0
    %775 = vmatpush2.xpose.msra.mxu0 0.0
    %776 = vmatprep.subr.mxu0 0.0
    %777 = vmatpush2.xpose.msra.mxu0 0.0
    %778 = vmatprep.subr.mxu0 0.0
    %779 = vmatpush2.xpose.msra.mxu0 0.0
    %780 = vmatprep.subr.mxu0 0.0
    %781 = vmatpush2.xpose.msra.mxu0 0.0
    %782 = vmatprep.subr.mxu0 0.0
    %783 = vmatpush2.xpose.msra.mxu0 0.0
    %784 = vmatprep.subr.mxu0 0.0
    %785 = vmatpush2.xpose.msra.mxu0 0.0
    %786 = vmatprep.subr.mxu0 0.0
    %787 = vmatpush2.xpose.msra.mxu0 0.0
    %788 = vmatprep.subr.mxu0 0.0
    %789 = vmatpush2.xpose.msra.mxu0 0.0
    %790 = vmatprep.subr.mxu0 0.0
    %791 = vmatpush2.xpose.msra.mxu0 0.0
    %792 = vmatprep.mubr.f32.mxu0 0.0
    %793 = vmatmul.mubr.f32.gmra.mxu0 %v724
    %v794 = vpop.f32.mrf.mxu0
    %v795 = vadd.f32 0.0, %v794
    %v796 = vpop.f32.mrf.mxu0
    %797 = vdwg.mxu0
    %798 = vrot.lane.b32.xlu0 %v250, 104
    %v799 = vpop.permute.xlu0 %798
    %800 = vrot.lane.b32.xlu0 %v250, 72
    %v801 = vpop.permute.xlu0 %800
    %v802 = vsel %vm256, %v799, 0
    %v804 = vsel %vm256, %v801, 0
    %806 = vmatprep.subr.mxu0 0.0
    %807 = vmatpush1.xpose.msra.mxu0 0.0
    %808 = vmatprep.subr.mxu0 0.0
    %809 = vmatpush1.xpose.msra.mxu0 0.0
    %810 = vmatprep.subr.mxu0 0.0
    %811 = vmatpush1.xpose.msra.mxu0 0.0
    %812 = vmatprep.subr.mxu0 0.0
    %813 = vmatpush1.xpose.msra.mxu0 0.0
    %814 = vmatprep.subr.mxu0 0.0
    %815 = vmatpush1.xpose.msra.mxu0 0.0
    %816 = vmatprep.subr.mxu0 0.0
    %817 = vmatpush1.xpose.msra.mxu0 0.0
    %818 = vmatprep.subr.mxu0 0.0
    %819 = vmatpush1.xpose.msra.mxu0 0.0
    %820 = vmatprep.subr.mxu0 0.0
    %821 = vmatpush1.xpose.msra.mxu0 0.0
    %822 = vmatprep.subr.mxu0 0.0
    %823 = vmatpush1.xpose.msra.mxu0 0.0
    %824 = vmatprep.subr.mxu0 0.0
    %825 = vmatpush1.xpose.msra.mxu0 0.0
    %826 = vmatprep.subr.mxu0 0.0
    %827 = vmatpush1.xpose.msra.mxu0 0.0
    %828 = vmatprep.subr.mxu0 0.0
    %829 = vmatpush1.xpose.msra.mxu0 0.0
    %830 = vmatprep.subr.mxu0 0.0
    %831 = vmatpush1.xpose.msra.mxu0 0.0
    %832 = vmatprep.subr.mxu0 0.0
    %833 = vmatpush1.xpose.msra.mxu0 0.0
    %834 = vmatprep.subr.mxu0 0.0
    %835 = vmatpush1.xpose.msra.mxu0 0.0
    %836 = vmatprep.subr.mxu0 0.0
    %837 = vmatpush1.xpose.msra.mxu0 %v804
    %838 = vmatprep.subr.mxu0 0.0
    %839 = vmatpush2.xpose.msra.mxu0 0.0
    %840 = vmatprep.subr.mxu0 0.0
    %841 = vmatpush2.xpose.msra.mxu0 0.0
    %842 = vmatprep.subr.mxu0 0.0
    %843 = vmatpush2.xpose.msra.mxu0 0.0
    %844 = vmatprep.subr.mxu0 0.0
    %845 = vmatpush2.xpose.msra.mxu0 0.0
    %846 = vmatprep.subr.mxu0 0.0
    %847 = vmatpush2.xpose.msra.mxu0 0.0
    %848 = vmatprep.subr.mxu0 0.0
    %849 = vmatpush2.xpose.msra.mxu0 0.0
    %850 = vmatprep.subr.mxu0 0.0
    %851 = vmatpush2.xpose.msra.mxu0 0.0
    %852 = vmatprep.subr.mxu0 0.0
    %853 = vmatpush2.xpose.msra.mxu0 0.0
    %854 = vmatprep.subr.mxu0 0.0
    %855 = vmatpush2.xpose.msra.mxu0 0.0
    %856 = vmatprep.subr.mxu0 0.0
    %857 = vmatpush2.xpose.msra.mxu0 0.0
    %858 = vmatprep.subr.mxu0 0.0
    %859 = vmatpush2.xpose.msra.mxu0 0.0
    %860 = vmatprep.subr.mxu0 0.0
    %861 = vmatpush2.xpose.msra.mxu0 0.0
    %862 = vmatprep.subr.mxu0 0.0
    %863 = vmatpush2.xpose.msra.mxu0 0.0
    %864 = vmatprep.subr.mxu0 0.0
    %865 = vmatpush2.xpose.msra.mxu0 0.0
    %866 = vmatprep.subr.mxu0 0.0
    %867 = vmatpush2.xpose.msra.mxu0 0.0
    %868 = vmatprep.subr.mxu0 0.0
    %869 = vmatpush2.xpose.msra.mxu0 0.0
    %870 = vmatprep.mubr.f32.mxu0 0.0
    %871 = vmatmul.mubr.f32.gmra.mxu0 %v802
    %v872 = vpop.f32.mrf.mxu0
    %v873 = vadd.f32 0.0, %v872
    %v874 = vpop.f32.mrf.mxu0
    %875 = vdwg.mxu0
    %877 = vrot.lane.b32.xlu0 %v406, 8
    %v878 = vpop.permute.xlu0 %877
    %881 = vrot.lane.b32.xlu0 %v484, 16
    %v882 = vpop.permute.xlu0 %881
    %885 = vrot.lane.b32.xlu0 %v562, 24
    %v886 = vpop.permute.xlu0 %885
    %889 = vrot.lane.b32.xlu0 %v639, 32
    %v890 = vpop.permute.xlu0 %889
    %893 = vrot.lane.b32.xlu0 %v717, 40
    %v894 = vpop.permute.xlu0 %893
    %897 = vrot.lane.b32.xlu0 %v795, 48
    %v898 = vpop.permute.xlu0 %897
    %901 = vrot.lane.b32.xlu0 %v873, 56
    %v902 = vpop.permute.xlu0 %901
    %v904 = vsel %vm256, %v328, %v878
    %vm905 = vcmask 130048
    %v906 = vsel %vm905, %v904, %v882
    %vm907 = vcmask 195584
    %v908 = vsel %vm907, %v906, %v886
    %v909 = vsel %vm171, %v908, %v890
    %vm910 = vcmask 326656
    %v911 = vsel %vm910, %v909, %v894
    %vm912 = vcmask 392192
    %v913 = vsel %vm912, %v911, %v898
    %vm914 = vcmask 457728
    %v915 = vsel %vm914, %v913, %v902
    %v916 = vmul.f32 %v915, 0.17677669
    %vm917 = vcmp.lt.s32.totalorder %v28, 0
    %v918 = vsub.s32 0, %v28
    %v919 = vsel %vm917, %v918, %v28
    %v920 = vshrl.u32 %v919, 3
    %v921 = vand.u32 %v919, 7
    %v922 = vsub.s32 0, %v921
    %v923 = vsel %vm917, %v922, %v921
    %vm924 = vcmp.ne.s32.totalorder %v923, 0
    %vm925 = vcmp.lt.s32.totalorder %v923, 0
    %vm926 = vmand %vm925, %vm924
    %v927 = vadd.s32 %v923, 8
    %v928 = vsel %vm926, %v927, %v923
    %vm929 = vcmp.gt.s32.totalorder %v928, %v30
    %v930 = vsel %vm929, -inf, 0.0
    %v931 = vadd.f32 %v916, %v930
    %vm932 = vcmask 523264
    %v933 = vsel %vm932, %v931, -inf
    %v934 = vrot.slane %v933, 4
    %v935 = vmax.f32 %v933, %v934
    %v936 = vrot.slane %v935, 2
    %v937 = vmax.f32 %v935, %v936
    %v938 = vrot.slane %v937, 1
    %v939 = vmax.f32 %v937, %v938
    %v940 = vsub.f32 %v931, %v939
    %v941 = vmul.f32 %v940, 1.442695
    %v942 = vpow.pop %v941
    %v943 = vsel %vm932, %v942, 0.0
    %v944 = vrot.slane %v943, 4
    %v945 = vadd.f32 %v943, %v944
    %v946 = vrot.slane %v945, 2
    %v947 = vadd.f32 %v945, %v946
    %v948 = vrot.slane %v947, 1
    %v949 = vadd.f32 %v947, %v948
    %v950 = vrcp.pop %v949
    %v951 = vmul.f32 %v942, %v950
    %952 = vrot.lane.b32.xlu0 %v245, 64
    %v953 = vpop.permute.xlu0 %952
    %v956 = vsel %vm256, %v951, 0
    %958 = vmatprep.subr.mxu0 0.0
    %959 = vmatpush1.msra.mxu0 0.0
    %960 = vmatprep.subr.mxu0 0.0
    %961 = vmatpush1.msra.mxu0 0.0
    %962 = vmatprep.subr.mxu0 0.0
    %963 = vmatpush1.msra.mxu0 0.0
    %964 = vmatprep.subr.mxu0 0.0
    %965 = vmatpush1.msra.mxu0 0.0
    %966 = vmatprep.subr.mxu0 0.0
    %967 = vmatpush1.msra.mxu0 0.0
    %968 = vmatprep.subr.mxu0 0.0
    %969 = vmatpush1.msra.mxu0 0.0
    %970 = vmatprep.subr.mxu0 0.0
    %971 = vmatpush1.msra.mxu0 0.0
    %972 = vmatprep.subr.mxu0 0.0
    %973 = vmatpush1.msra.mxu0 0.0
    %974 = vmatprep.subr.mxu0 0.0
    %975 = vmatpush1.msra.mxu0 0.0
    %976 = vmatprep.subr.mxu0 0.0
    %977 = vmatpush1.msra.mxu0 0.0
    %978 = vmatprep.subr.mxu0 0.0
    %979 = vmatpush1.msra.mxu0 0.0
    %980 = vmatprep.subr.mxu0 0.0
    %981 = vmatpush1.msra.mxu0 0.0
    %982 = vmatprep.subr.mxu0 0.0
    %983 = vmatpush1.msra.mxu0 0.0
    %984 = vmatprep.subr.mxu0 0.0
    %985 = vmatpush1.msra.mxu0 0.0
    %986 = vmatprep.subr.mxu0 0.0
    %987 = vmatpush1.msra.mxu0 0.0
    %988 = vmatprep.subr.mxu0 0.0
    %989 = vmatpush1.msra.mxu0 %v953
    %990 = vmatprep.subr.mxu0 0.0
    %991 = vmatpush2.msra.mxu0 0.0
    %992 = vmatprep.subr.mxu0 0.0
    %993 = vmatpush2.msra.mxu0 0.0
    %994 = vmatprep.subr.mxu0 0.0
    %995 = vmatpush2.msra.mxu0 0.0
    %996 = vmatprep.subr.mxu0 0.0
    %997 = vmatpush2.msra.mxu0 0.0
    %998 = vmatprep.subr.mxu0 0.0
    %999 = vmatpush2.msra.mxu0 0.0
    %1000 = vmatprep.subr.mxu0 0.0
    %1001 = vmatpush2.msra.mxu0 0.0
    %1002 = vmatprep.subr.mxu0 0.0
    %1003 = vmatpush2.msra.mxu0 0.0
    %1004 = vmatprep.subr.mxu0 0.0
    %1005 = vmatpush2.msra.mxu0 0.0
    %1006 = vmatprep.subr.mxu0 0.0
    %1007 = vmatpush2.msra.mxu0 0.0
    %1008 = vmatprep.subr.mxu0 0.0
    %1009 = vmatpush2.msra.mxu0 0.0
    %1010 = vmatprep.subr.mxu0 0.0
    %1011 = vmatpush2.msra.mxu0 0.0
    %1012 = vmatprep.subr.mxu0 0.0
    %1013 = vmatpush2.msra.mxu0 0.0
    %1014 = vmatprep.subr.mxu0 0.0
    %1015 = vmatpush2.msra.mxu0 0.0
    %1016 = vmatprep.subr.mxu0 0.0
    %1017 = vmatpush2.msra.mxu0 0.0
    %1018 = vmatprep.subr.mxu0 0.0
    %1019 = vmatpush2.msra.mxu0 0.0
    %1020 = vmatprep.subr.mxu0 0.0
    %1021 = vmatpush2.msra.mxu0 0.0
    %1022 = vmatprep.mubr.f32.mxu0 0.0
    %1023 = vmatmul.mubr.f32.gmra.mxu0 %v956
    %v1024 = vpop.f32.mrf.mxu0
    %v1025 = vadd.f32 0.0, %v1024
    %v1026 = vpop.f32.mrf.mxu0
    %1027 = vdwg.mxu0
    %1028 = vrot.lane.b32.xlu0 %v951, 120
    %v1029 = vpop.permute.xlu0 %1028
    %1030 = vrot.lane.b32.xlu0 %v245, 56
    %v1031 = vpop.permute.xlu0 %1030
    %v1033 = vsel %vm256, %v1029, 0
    %1035 = vmatprep.subr.mxu0 0.0
    %1036 = vmatpush1.msra.mxu0 0.0
    %1037 = vmatprep.subr.mxu0 0.0
    %1038 = vmatpush1.msra.mxu0 0.0
    %1039 = vmatprep.subr.mxu0 0.0
    %1040 = vmatpush1.msra.mxu0 0.0
    %1041 = vmatprep.subr.mxu0 0.0
    %1042 = vmatpush1.msra.mxu0 0.0
    %1043 = vmatprep.subr.mxu0 0.0
    %1044 = vmatpush1.msra.mxu0 0.0
    %1045 = vmatprep.subr.mxu0 0.0
    %1046 = vmatpush1.msra.mxu0 0.0
    %1047 = vmatprep.subr.mxu0 0.0
    %1048 = vmatpush1.msra.mxu0 0.0
    %1049 = vmatprep.subr.mxu0 0.0
    %1050 = vmatpush1.msra.mxu0 0.0
    %1051 = vmatprep.subr.mxu0 0.0
    %1052 = vmatpush1.msra.mxu0 0.0
    %1053 = vmatprep.subr.mxu0 0.0
    %1054 = vmatpush1.msra.mxu0 0.0
    %1055 = vmatprep.subr.mxu0 0.0
    %1056 = vmatpush1.msra.mxu0 0.0
    %1057 = vmatprep.subr.mxu0 0.0
    %1058 = vmatpush1.msra.mxu0 0.0
    %1059 = vmatprep.subr.mxu0 0.0
    %1060 = vmatpush1.msra.mxu0 0.0
    %1061 = vmatprep.subr.mxu0 0.0
    %1062 = vmatpush1.msra.mxu0 0.0
    %1063 = vmatprep.subr.mxu0 0.0
    %1064 = vmatpush1.msra.mxu0 0.0
    %1065 = vmatprep.subr.mxu0 0.0
    %1066 = vmatpush1.msra.mxu0 %v1031
    %1067 = vmatprep.subr.mxu0 0.0
    %1068 = vmatpush2.msra.mxu0 0.0
    %1069 = vmatprep.subr.mxu0 0.0
    %1070 = vmatpush2.msra.mxu0 0.0
    %1071 = vmatprep.subr.mxu0 0.0
    %1072 = vmatpush2.msra.mxu0 0.0
    %1073 = vmatprep.subr.mxu0 0.0
    %1074 = vmatpush2.msra.mxu0 0.0
    %1075 = vmatprep.subr.mxu0 0.0
    %1076 = vmatpush2.msra.mxu0 0.0
    %1077 = vmatprep.subr.mxu0 0.0
    %1078 = vmatpush2.msra.mxu0 0.0
    %1079 = vmatprep.subr.mxu0 0.0
    %1080 = vmatpush2.msra.mxu0 0.0
    %1081 = vmatprep.subr.mxu0 0.0
    %1082 = vmatpush2.msra.mxu0 0.0
    %1083 = vmatprep.subr.mxu0 0.0
    %1084 = vmatpush2.msra.mxu0 0.0
    %1085 = vmatprep.subr.mxu0 0.0
    %1086 = vmatpush2.msra.mxu0 0.0
    %1087 = vmatprep.subr.mxu0 0.0
    %1088 = vmatpush2.msra.mxu0 0.0
    %1089 = vmatprep.subr.mxu0 0.0
    %1090 = vmatpush2.msra.mxu0 0.0
    %1091 = vmatprep.subr.mxu0 0.0
    %1092 = vmatpush2.msra.mxu0 0.0
    %1093 = vmatprep.subr.mxu0 0.0
    %1094 = vmatpush2.msra.mxu0 0.0
    %1095 = vmatprep.subr.mxu0 0.0
    %1096 = vmatpush2.msra.mxu0 0.0
    %1097 = vmatprep.subr.mxu0 0.0
    %1098 = vmatpush2.msra.mxu0 0.0
    %1099 = vmatprep.mubr.f32.mxu0 0.0
    %1100 = vmatmul.mubr.f32.gmra.mxu0 %v1033
    %v1101 = vpop.f32.mrf.mxu0
    %v1102 = vadd.f32 0.0, %v1101
    %v1103 = vpop.f32.mrf.mxu0
    %1104 = vdwg.mxu0
    %1105 = vrot.lane.b32.xlu0 %v951, 112
    %v1106 = vpop.permute.xlu0 %1105
    %1107 = vrot.lane.b32.xlu0 %v245, 48
    %v1108 = vpop.permute.xlu0 %1107
    %v1110 = vsel %vm256, %v1106, 0
    %1112 = vmatprep.subr.mxu0 0.0
    %1113 = vmatpush1.msra.mxu0 0.0
    %1114 = vmatprep.subr.mxu0 0.0
    %1115 = vmatpush1.msra.mxu0 0.0
    %1116 = vmatprep.subr.mxu0 0.0
    %1117 = vmatpush1.msra.mxu0 0.0
    %1118 = vmatprep.subr.mxu0 0.0
    %1119 = vmatpush1.msra.mxu0 0.0
    %1120 = vmatprep.subr.mxu0 0.0
    %1121 = vmatpush1.msra.mxu0 0.0
    %1122 = vmatprep.subr.mxu0 0.0
    %1123 = vmatpush1.msra.mxu0 0.0
    %1124 = vmatprep.subr.mxu0 0.0
    %1125 = vmatpush1.msra.mxu0 0.0
    %1126 = vmatprep.subr.mxu0 0.0
    %1127 = vmatpush1.msra.mxu0 0.0
    %1128 = vmatprep.subr.mxu0 0.0
    %1129 = vmatpush1.msra.mxu0 0.0
    %1130 = vmatprep.subr.mxu0 0.0
    %1131 = vmatpush1.msra.mxu0 0.0
    %1132 = vmatprep.subr.mxu0 0.0
    %1133 = vmatpush1.msra.mxu0 0.0
    %1134 = vmatprep.subr.mxu0 0.0
    %1135 = vmatpush1.msra.mxu0 0.0
    %1136 = vmatprep.subr.mxu0 0.0
    %1137 = vmatpush1.msra.mxu0 0.0
    %1138 = vmatprep.subr.mxu0 0.0
    %1139 = vmatpush1.msra.mxu0 0.0
    %1140 = vmatprep.subr.mxu0 0.0
    %1141 = vmatpush1.msra.mxu0 0.0
    %1142 = vmatprep.subr.mxu0 0.0
    %1143 = vmatpush1.msra.mxu0 %v1108
    %1144 = vmatprep.subr.mxu0 0.0
    %1145 = vmatpush2.msra.mxu0 0.0
    %1146 = vmatprep.subr.mxu0 0.0
    %1147 = vmatpush2.msra.mxu0 0.0
    %1148 = vmatprep.subr.mxu0 0.0
    %1149 = vmatpush2.msra.mxu0 0.0
    %1150 = vmatprep.subr.mxu0 0.0
    %1151 = vmatpush2.msra.mxu0 0.0
    %1152 = vmatprep.subr.mxu0 0.0
    %1153 = vmatpush2.msra.mxu0 0.0
    %1154 = vmatprep.subr.mxu0 0.0
    %1155 = vmatpush2.msra.mxu0 0.0
    %1156 = vmatprep.subr.mxu0 0.0
    %1157 = vmatpush2.msra.mxu0 0.0
    %1158 = vmatprep.subr.mxu0 0.0
    %1159 = vmatpush2.msra.mxu0 0.0
    %1160 = vmatprep.subr.mxu0 0.0
    %1161 = vmatpush2.msra.mxu0 0.0
    %1162 = vmatprep.subr.mxu0 0.0
    %1163 = vmatpush2.msra.mxu0 0.0
    %1164 = vmatprep.subr.mxu0 0.0
    %1165 = vmatpush2.msra.mxu0 0.0
    %1166 = vmatprep.subr.mxu0 0.0
    %1167 = vmatpush2.msra.mxu0 0.0
    %1168 = vmatprep.subr.mxu0 0.0
    %1169 = vmatpush2.msra.mxu0 0.0
    %1170 = vmatprep.subr.mxu0 0.0
    %1171 = vmatpush2.msra.mxu0 0.0
    %1172 = vmatprep.subr.mxu0 0.0
    %1173 = vmatpush2.msra.mxu0 0.0
    %1174 = vmatprep.subr.mxu0 0.0
    %1175 = vmatpush2.msra.mxu0 0.0
    %1176 = vmatprep.mubr.f32.mxu0 0.0
    %1177 = vmatmul.mubr.f32.gmra.mxu0 %v1110
    %v1178 = vpop.f32.mrf.mxu0
    %v1179 = vadd.f32 0.0, %v1178
    %v1180 = vpop.f32.mrf.mxu0
    %1181 = vdwg.mxu0
    %1182 = vrot.lane.b32.xlu0 %v951, 104
    %v1183 = vpop.permute.xlu0 %1182
    %1184 = vrot.lane.b32.xlu0 %v245, 40
    %v1185 = vpop.permute.xlu0 %1184
    %v1187 = vsel %vm256, %v1183, 0
    %1189 = vmatprep.subr.mxu0 0.0
    %1190 = vmatpush1.msra.mxu0 0.0
    %1191 = vmatprep.subr.mxu0 0.0
    %1192 = vmatpush1.msra.mxu0 0.0
    %1193 = vmatprep.subr.mxu0 0.0
    %1194 = vmatpush1.msra.mxu0 0.0
    %1195 = vmatprep.subr.mxu0 0.0
    %1196 = vmatpush1.msra.mxu0 0.0
    %1197 = vmatprep.subr.mxu0 0.0
    %1198 = vmatpush1.msra.mxu0 0.0
    %1199 = vmatprep.subr.mxu0 0.0
    %1200 = vmatpush1.msra.mxu0 0.0
    %1201 = vmatprep.subr.mxu0 0.0
    %1202 = vmatpush1.msra.mxu0 0.0
    %1203 = vmatprep.subr.mxu0 0.0
    %1204 = vmatpush1.msra.mxu0 0.0
    %1205 = vmatprep.subr.mxu0 0.0
    %1206 = vmatpush1.msra.mxu0 0.0
    %1207 = vmatprep.subr.mxu0 0.0
    %1208 = vmatpush1.msra.mxu0 0.0
    %1209 = vmatprep.subr.mxu0 0.0
    %1210 = vmatpush1.msra.mxu0 0.0
    %1211 = vmatprep.subr.mxu0 0.0
    %1212 = vmatpush1.msra.mxu0 0.0
    %1213 = vmatprep.subr.mxu0 0.0
    %1214 = vmatpush1.msra.mxu0 0.0
    %1215 = vmatprep.subr.mxu0 0.0
    %1216 = vmatpush1.msra.mxu0 0.0
    %1217 = vmatprep.subr.mxu0 0.0
    %1218 = vmatpush1.msra.mxu0 0.0
    %1219 = vmatprep.subr.mxu0 0.0
    %1220 = vmatpush1.msra.mxu0 %v1185
    %1221 = vmatprep.subr.mxu0 0.0
    %1222 = vmatpush2.msra.mxu0 0.0
    %1223 = vmatprep.subr.mxu0 0.0
    %1224 = vmatpush2.msra.mxu0 0.0
    %1225 = vmatprep.subr.mxu0 0.0
    %1226 = vmatpush2.msra.mxu0 0.0
    %1227 = vmatprep.subr.mxu0 0.0
    %1228 = vmatpush2.msra.mxu0 0.0
    %1229 = vmatprep.subr.mxu0 0.0
    %1230 = vmatpush2.msra.mxu0 0.0
    %1231 = vmatprep.subr.mxu0 0.0
    %1232 = vmatpush2.msra.mxu0 0.0
    %1233 = vmatprep.subr.mxu0 0.0
    %1234 = vmatpush2.msra.mxu0 0.0
    %1235 = vmatprep.subr.mxu0 0.0
    %1236 = vmatpush2.msra.mxu0 0.0
    %1237 = vmatprep.subr.mxu0 0.0
    %1238 = vmatpush2.msra.mxu0 0.0
    %1239 = vmatprep.subr.mxu0 0.0
    %1240 = vmatpush2.msra.mxu0 0.0
    %1241 = vmatprep.subr.mxu0 0.0
    %1242 = vmatpush2.msra.mxu0 0.0
    %1243 = vmatprep.subr.mxu0 0.0
    %1244 = vmatpush2.msra.mxu0 0.0
    %1245 = vmatprep.subr.mxu0 0.0
    %1246 = vmatpush2.msra.mxu0 0.0
    %1247 = vmatprep.subr.mxu0 0.0
    %1248 = vmatpush2.msra.mxu0 0.0
    %1249 = vmatprep.subr.mxu0 0.0
    %1250 = vmatpush2.msra.mxu0 0.0
    %1251 = vmatprep.subr.mxu0 0.0
    %1252 = vmatpush2.msra.mxu0 0.0
    %1253 = vmatprep.mubr.f32.mxu0 0.0
    %1254 = vmatmul.mubr.f32.gmra.mxu0 %v1187
    %v1255 = vpop.f32.mrf.mxu0
    %v1256 = vadd.f32 0.0, %v1255
    %v1257 = vpop.f32.mrf.mxu0
    %1258 = vdwg.mxu0
    %1260 = vrot.lane.b32.xlu0 %v1102, 8
    %v1261 = vpop.permute.xlu0 %1260
    %1264 = vrot.lane.b32.xlu0 %v1179, 16
    %v1265 = vpop.permute.xlu0 %1264
    %1268 = vrot.lane.b32.xlu0 %v1256, 24
    %v1269 = vpop.permute.xlu0 %1268
    %v1271 = vsel %vm256, %v1025, %v1261
    %v1272 = vsel %vm905, %v1271, %v1265
    %v1273 = vsel %vm907, %v1272, %v1269
    %1274 = vrot.lane.b32.xlu0 %v951, 96
    %v1275 = vpop.permute.xlu0 %1274
    %1276 = vrot.lane.b32.xlu0 %v250, 64
    %v1277 = vpop.permute.xlu0 %1276
    %v1279 = vsel %vm256, %v1275, 0
    %1281 = vmatprep.subr.mxu0 0.0
    %1282 = vmatpush1.msra.mxu0 0.0
    %1283 = vmatprep.subr.mxu0 0.0
    %1284 = vmatpush1.msra.mxu0 0.0
    %1285 = vmatprep.subr.mxu0 0.0
    %1286 = vmatpush1.msra.mxu0 0.0
    %1287 = vmatprep.subr.mxu0 0.0
    %1288 = vmatpush1.msra.mxu0 0.0
    %1289 = vmatprep.subr.mxu0 0.0
    %1290 = vmatpush1.msra.mxu0 0.0
    %1291 = vmatprep.subr.mxu0 0.0
    %1292 = vmatpush1.msra.mxu0 0.0
    %1293 = vmatprep.subr.mxu0 0.0
    %1294 = vmatpush1.msra.mxu0 0.0
    %1295 = vmatprep.subr.mxu0 0.0
    %1296 = vmatpush1.msra.mxu0 0.0
    %1297 = vmatprep.subr.mxu0 0.0
    %1298 = vmatpush1.msra.mxu0 0.0
    %1299 = vmatprep.subr.mxu0 0.0
    %1300 = vmatpush1.msra.mxu0 0.0
    %1301 = vmatprep.subr.mxu0 0.0
    %1302 = vmatpush1.msra.mxu0 0.0
    %1303 = vmatprep.subr.mxu0 0.0
    %1304 = vmatpush1.msra.mxu0 0.0
    %1305 = vmatprep.subr.mxu0 0.0
    %1306 = vmatpush1.msra.mxu0 0.0
    %1307 = vmatprep.subr.mxu0 0.0
    %1308 = vmatpush1.msra.mxu0 0.0
    %1309 = vmatprep.subr.mxu0 0.0
    %1310 = vmatpush1.msra.mxu0 0.0
    %1311 = vmatprep.subr.mxu0 0.0
    %1312 = vmatpush1.msra.mxu0 %v1277
    %1313 = vmatprep.subr.mxu0 0.0
    %1314 = vmatpush2.msra.mxu0 0.0
    %1315 = vmatprep.subr.mxu0 0.0
    %1316 = vmatpush2.msra.mxu0 0.0
    %1317 = vmatprep.subr.mxu0 0.0
    %1318 = vmatpush2.msra.mxu0 0.0
    %1319 = vmatprep.subr.mxu0 0.0
    %1320 = vmatpush2.msra.mxu0 0.0
    %1321 = vmatprep.subr.mxu0 0.0
    %1322 = vmatpush2.msra.mxu0 0.0
    %1323 = vmatprep.subr.mxu0 0.0
    %1324 = vmatpush2.msra.mxu0 0.0
    %1325 = vmatprep.subr.mxu0 0.0
    %1326 = vmatpush2.msra.mxu0 0.0
    %1327 = vmatprep.subr.mxu0 0.0
    %1328 = vmatpush2.msra.mxu0 0.0
    %1329 = vmatprep.subr.mxu0 0.0
    %1330 = vmatpush2.msra.mxu0 0.0
    %1331 = vmatprep.subr.mxu0 0.0
    %1332 = vmatpush2.msra.mxu0 0.0
    %1333 = vmatprep.subr.mxu0 0.0
    %1334 = vmatpush2.msra.mxu0 0.0
    %1335 = vmatprep.subr.mxu0 0.0
    %1336 = vmatpush2.msra.mxu0 0.0
    %1337 = vmatprep.subr.mxu0 0.0
    %1338 = vmatpush2.msra.mxu0 0.0
    %1339 = vmatprep.subr.mxu0 0.0
    %1340 = vmatpush2.msra.mxu0 0.0
    %1341 = vmatprep.subr.mxu0 0.0
    %1342 = vmatpush2.msra.mxu0 0.0
    %1343 = vmatprep.subr.mxu0 0.0
    %1344 = vmatpush2.msra.mxu0 0.0
    %1345 = vmatprep.mubr.f32.mxu0 0.0
    %1346 = vmatmul.mubr.f32.gmra.mxu0 %v1279
    %v1347 = vpop.f32.mrf.mxu0
    %v1348 = vadd.f32 0.0, %v1347
    %v1349 = vpop.f32.mrf.mxu0
    %1350 = vdwg.mxu0
    %1351 = vrot.lane.b32.xlu0 %v951, 88
    %v1352 = vpop.permute.xlu0 %1351
    %1353 = vrot.lane.b32.xlu0 %v250, 56
    %v1354 = vpop.permute.xlu0 %1353
    %v1356 = vsel %vm256, %v1352, 0
    %1358 = vmatprep.subr.mxu0 0.0
    %1359 = vmatpush1.msra.mxu0 0.0
    %1360 = vmatprep.subr.mxu0 0.0
    %1361 = vmatpush1.msra.mxu0 0.0
    %1362 = vmatprep.subr.mxu0 0.0
    %1363 = vmatpush1.msra.mxu0 0.0
    %1364 = vmatprep.subr.mxu0 0.0
    %1365 = vmatpush1.msra.mxu0 0.0
    %1366 = vmatprep.subr.mxu0 0.0
    %1367 = vmatpush1.msra.mxu0 0.0
    %1368 = vmatprep.subr.mxu0 0.0
    %1369 = vmatpush1.msra.mxu0 0.0
    %1370 = vmatprep.subr.mxu0 0.0
    %1371 = vmatpush1.msra.mxu0 0.0
    %1372 = vmatprep.subr.mxu0 0.0
    %1373 = vmatpush1.msra.mxu0 0.0
    %1374 = vmatprep.subr.mxu0 0.0
    %1375 = vmatpush1.msra.mxu0 0.0
    %1376 = vmatprep.subr.mxu0 0.0
    %1377 = vmatpush1.msra.mxu0 0.0
    %1378 = vmatprep.subr.mxu0 0.0
    %1379 = vmatpush1.msra.mxu0 0.0
    %1380 = vmatprep.subr.mxu0 0.0
    %1381 = vmatpush1.msra.mxu0 0.0
    %1382 = vmatprep.subr.mxu0 0.0
    %1383 = vmatpush1.msra.mxu0 0.0
    %1384 = vmatprep.subr.mxu0 0.0
    %1385 = vmatpush1.msra.mxu0 0.0
    %1386 = vmatprep.subr.mxu0 0.0
    %1387 = vmatpush1.msra.mxu0 0.0
    %1388 = vmatprep.subr.mxu0 0.0
    %1389 = vmatpush1.msra.mxu0 %v1354
    %1390 = vmatprep.subr.mxu0 0.0
    %1391 = vmatpush2.msra.mxu0 0.0
    %1392 = vmatprep.subr.mxu0 0.0
    %1393 = vmatpush2.msra.mxu0 0.0
    %1394 = vmatprep.subr.mxu0 0.0
    %1395 = vmatpush2.msra.mxu0 0.0
    %1396 = vmatprep.subr.mxu0 0.0
    %1397 = vmatpush2.msra.mxu0 0.0
    %1398 = vmatprep.subr.mxu0 0.0
    %1399 = vmatpush2.msra.mxu0 0.0
    %1400 = vmatprep.subr.mxu0 0.0
    %1401 = vmatpush2.msra.mxu0 0.0
    %1402 = vmatprep.subr.mxu0 0.0
    %1403 = vmatpush2.msra.mxu0 0.0
    %1404 = vmatprep.subr.mxu0 0.0
    %1405 = vmatpush2.msra.mxu0 0.0
    %1406 = vmatprep.subr.mxu0 0.0
    %1407 = vmatpush2.msra.mxu0 0.0
    %1408 = vmatprep.subr.mxu0 0.0
    %1409 = vmatpush2.msra.mxu0 0.0
    %1410 = vmatprep.subr.mxu0 0.0
    %1411 = vmatpush2.msra.mxu0 0.0
    %1412 = vmatprep.subr.mxu0 0.0
    %1413 = vmatpush2.msra.mxu0 0.0
    %1414 = vmatprep.subr.mxu0 0.0
    %1415 = vmatpush2.msra.mxu0 0.0
    %1416 = vmatprep.subr.mxu0 0.0
    %1417 = vmatpush2.msra.mxu0 0.0
    %1418 = vmatprep.subr.mxu0 0.0
    %1419 = vmatpush2.msra.mxu0 0.0
    %1420 = vmatprep.subr.mxu0 0.0
    %1421 = vmatpush2.msra.mxu0 0.0
    %1422 = vmatprep.mubr.f32.mxu0 0.0
    %1423 = vmatmul.mubr.f32.gmra.mxu0 %v1356
    %v1424 = vpop.f32.mrf.mxu0
    %v1425 = vadd.f32 0.0, %v1424
    %v1426 = vpop.f32.mrf.mxu0
    %1427 = vdwg.mxu0
    %1428 = vrot.lane.b32.xlu0 %v951, 80
    %v1429 = vpop.permute.xlu0 %1428
    %1430 = vrot.lane.b32.xlu0 %v250, 48
    %v1431 = vpop.permute.xlu0 %1430
    %v1433 = vsel %vm256, %v1429, 0
    %1435 = vmatprep.subr.mxu0 0.0
    %1436 = vmatpush1.msra.mxu0 0.0
    %1437 = vmatprep.subr.mxu0 0.0
    %1438 = vmatpush1.msra.mxu0 0.0
    %1439 = vmatprep.subr.mxu0 0.0
    %1440 = vmatpush1.msra.mxu0 0.0
    %1441 = vmatprep.subr.mxu0 0.0
    %1442 = vmatpush1.msra.mxu0 0.0
    %1443 = vmatprep.subr.mxu0 0.0
    %1444 = vmatpush1.msra.mxu0 0.0
    %1445 = vmatprep.subr.mxu0 0.0
    %1446 = vmatpush1.msra.mxu0 0.0
    %1447 = vmatprep.subr.mxu0 0.0
    %1448 = vmatpush1.msra.mxu0 0.0
    %1449 = vmatprep.subr.mxu0 0.0
    %1450 = vmatpush1.msra.mxu0 0.0
    %1451 = vmatprep.subr.mxu0 0.0
    %1452 = vmatpush1.msra.mxu0 0.0
    %1453 = vmatprep.subr.mxu0 0.0
    %1454 = vmatpush1.msra.mxu0 0.0
    %1455 = vmatprep.subr.mxu0 0.0
    %1456 = vmatpush1.msra.mxu0 0.0
    %1457 = vmatprep.subr.mxu0 0.0
    %1458 = vmatpush1.msra.mxu0 0.0
    %1459 = vmatprep.subr.mxu0 0.0
    %1460 = vmatpush1.msra.mxu0 0.0
    %1461 = vmatprep.subr.mxu0 0.0
    %1462 = vmatpush1.msra.mxu0 0.0
    %1463 = vmatprep.subr.mxu0 0.0
    %1464 = vmatpush1.msra.mxu0 0.0
    %1465 = vmatprep.subr.mxu0 0.0
    %1466 = vmatpush1.msra.mxu0 %v1431
    %1467 = vmatprep.subr.mxu0 0.0
    %1468 = vmatpush2.msra.mxu0 0.0
    %1469 = vmatprep.subr.mxu0 0.0
    %1470 = vmatpush2.msra.mxu0 0.0
    %1471 = vmatprep.subr.mxu0 0.0
    %1472 = vmatpush2.msra.mxu0 0.0
    %1473 = vmatprep.subr.mxu0 0.0
    %1474 = vmatpush2.msra.mxu0 0.0
    %1475 = vmatprep.subr.mxu0 0.0
    %1476 = vmatpush2.msra.mxu0 0.0
    %1477 = vmatprep.subr.mxu0 0.0
    %1478 = vmatpush2.msra.mxu0 0.0
    %1479 = vmatprep.subr.mxu0 0.0
    %1480 = vmatpush2.msra.mxu0 0.0
    %1481 = vmatprep.subr.mxu0 0.0
    %1482 = vmatpush2.msra.mxu0 0.0
    %1483 = vmatprep.subr.mxu0 0.0
    %1484 = vmatpush2.msra.mxu0 0.0
    %1485 = vmatprep.subr.mxu0 0.0
    %1486 = vmatpush2.msra.mxu0 0.0
    %1487 = vmatprep.subr.mxu0 0.0
    %1488 = vmatpush2.msra.mxu0 0.0
    %1489 = vmatprep.subr.mxu0 0.0
    %1490 = vmatpush2.msra.mxu0 0.0
    %1491 = vmatprep.subr.mxu0 0.0
    %1492 = vmatpush2.msra.mxu0 0.0
    %1493 = vmatprep.subr.mxu0 0.0
    %1494 = vmatpush2.msra.mxu0 0.0
    %1495 = vmatprep.subr.mxu0 0.0
    %1496 = vmatpush2.msra.mxu0 0.0
    %1497 = vmatprep.subr.mxu0 0.0
    %1498 = vmatpush2.msra.mxu0 0.0
    %1499 = vmatprep.mubr.f32.mxu0 0.0
    %1500 = vmatmul.mubr.f32.gmra.mxu0 %v1433
    %v1501 = vpop.f32.mrf.mxu0
    %v1502 = vadd.f32 0.0, %v1501
    %v1503 = vpop.f32.mrf.mxu0
    %1504 = vdwg.mxu0
    %1505 = vrot.lane.b32.xlu0 %v951, 72
    %v1506 = vpop.permute.xlu0 %1505
    %1507 = vrot.lane.b32.xlu0 %v250, 40
    %v1508 = vpop.permute.xlu0 %1507
    %v1510 = vsel %vm256, %v1506, 0
    %1512 = vmatprep.subr.mxu0 0.0
    %1513 = vmatpush1.msra.mxu0 0.0
    %1514 = vmatprep.subr.mxu0 0.0
    %1515 = vmatpush1.msra.mxu0 0.0
    %1516 = vmatprep.subr.mxu0 0.0
    %1517 = vmatpush1.msra.mxu0 0.0
    %1518 = vmatprep.subr.mxu0 0.0
    %1519 = vmatpush1.msra.mxu0 0.0
    %1520 = vmatprep.subr.mxu0 0.0
    %1521 = vmatpush1.msra.mxu0 0.0
    %1522 = vmatprep.subr.mxu0 0.0
    %1523 = vmatpush1.msra.mxu0 0.0
    %1524 = vmatprep.subr.mxu0 0.0
    %1525 = vmatpush1.msra.mxu0 0.0
    %1526 = vmatprep.subr.mxu0 0.0
    %1527 = vmatpush1.msra.mxu0 0.0
    %1528 = vmatprep.subr.mxu0 0.0
    %1529 = vmatpush1.msra.mxu0 0.0
    %1530 = vmatprep.subr.mxu0 0.0
    %1531 = vmatpush1.msra.mxu0 0.0
    %1532 = vmatprep.subr.mxu0 0.0
    %1533 = vmatpush1.msra.mxu0 0.0
    %1534 = vmatprep.subr.mxu0 0.0
    %1535 = vmatpush1.msra.mxu0 0.0
    %1536 = vmatprep.subr.mxu0 0.0
    %1537 = vmatpush1.msra.mxu0 0.0
    %1538 = vmatprep.subr.mxu0 0.0
    %1539 = vmatpush1.msra.mxu0 0.0
    %1540 = vmatprep.subr.mxu0 0.0
    %1541 = vmatpush1.msra.mxu0 0.0
    %1542 = vmatprep.subr.mxu0 0.0
    %1543 = vmatpush1.msra.mxu0 %v1508
    %1544 = vmatprep.subr.mxu0 0.0
    %1545 = vmatpush2.msra.mxu0 0.0
    %1546 = vmatprep.subr.mxu0 0.0
    %1547 = vmatpush2.msra.mxu0 0.0
    %1548 = vmatprep.subr.mxu0 0.0
    %1549 = vmatpush2.msra.mxu0 0.0
    %1550 = vmatprep.subr.mxu0 0.0
    %1551 = vmatpush2.msra.mxu0 0.0
    %1552 = vmatprep.subr.mxu0 0.0
    %1553 = vmatpush2.msra.mxu0 0.0
    %1554 = vmatprep.subr.mxu0 0.0
    %1555 = vmatpush2.msra.mxu0 0.0
    %1556 = vmatprep.subr.mxu0 0.0
    %1557 = vmatpush2.msra.mxu0 0.0
    %1558 = vmatprep.subr.mxu0 0.0
    %1559 = vmatpush2.msra.mxu0 0.0
    %1560 = vmatprep.subr.mxu0 0.0
    %1561 = vmatpush2.msra.mxu0 0.0
    %1562 = vmatprep.subr.mxu0 0.0
    %1563 = vmatpush2.msra.mxu0 0.0
    %1564 = vmatprep.subr.mxu0 0.0
    %1565 = vmatpush2.msra.mxu0 0.0
    %1566 = vmatprep.subr.mxu0 0.0
    %1567 = vmatpush2.msra.mxu0 0.0
    %1568 = vmatprep.subr.mxu0 0.0
    %1569 = vmatpush2.msra.mxu0 0.0
    %1570 = vmatprep.subr.mxu0 0.0
    %1571 = vmatpush2.msra.mxu0 0.0
    %1572 = vmatprep.subr.mxu0 0.0
    %1573 = vmatpush2.msra.mxu0 0.0
    %1574 = vmatprep.subr.mxu0 0.0
    %1575 = vmatpush2.msra.mxu0 0.0
    %1576 = vmatprep.mubr.f32.mxu0 0.0
    %1577 = vmatmul.mubr.f32.gmra.mxu0 %v1510
    %v1578 = vpop.f32.mrf.mxu0
    %v1579 = vadd.f32 0.0, %v1578
    %v1580 = vpop.f32.mrf.mxu0
    %1581 = vdwg.mxu0
    %1583 = vrot.lane.b32.xlu0 %v1425, 8
    %v1584 = vpop.permute.xlu0 %1583
    %1587 = vrot.lane.b32.xlu0 %v1502, 16
    %v1588 = vpop.permute.xlu0 %1587
    %1591 = vrot.lane.b32.xlu0 %v1579, 24
    %v1592 = vpop.permute.xlu0 %1591
    %v1594 = vsel %vm256, %v1348, %v1584
    %v1595 = vsel %vm905, %v1594, %v1588
    %v1596 = vsel %vm907, %v1595, %v1592
    %v1597 = vld [vmem:[%s3] sm:$0xff]
    %v1598 = vld [vmem:[%s3 + $0x8] sm:$0xff]
    %v1599 = vld [vmem:[%s3 + $0x10] sm:$0xff]
    %v1600 = vld [vmem:[%s3 + $0x18] sm:$0xff]
    %v1601 = vld [vmem:[%s4] sm:$0x1]
    %v1603 = vlaneseq
    %v1604 = vshrl.u32 %v1603, 7
    %v1605 = vsub.s32 0, %v1604
    %v1606 = vrot.slane %v1601, %v1605
    %v1609 = vsel %vm171, %v1273, 0
    %v1612 = vsel %vm171, %v1596, 0
    %1614 = vmatprep.subr.mxu0 0.0
    %1615 = vmatpush1.msra.mxu0 0.0
    %1616 = vmatprep.subr.mxu0 0.0
    %1617 = vmatpush1.msra.mxu0 0.0
    %1618 = vmatprep.subr.mxu0 0.0
    %1619 = vmatpush1.msra.mxu0 0.0
    %1620 = vmatprep.subr.mxu0 0.0
    %1621 = vmatpush1.msra.mxu0 0.0
    %1622 = vmatprep.subr.mxu0 0.0
    %1623 = vmatpush1.msra.mxu0 0.0
    %1624 = vmatprep.subr.mxu0 0.0
    %1625 = vmatpush1.msra.mxu0 0.0
    %1626 = vmatprep.subr.mxu0 0.0
    %1627 = vmatpush1.msra.mxu0 0.0
    %1628 = vmatprep.subr.mxu0 0.0
    %1629 = vmatpush1.msra.mxu0 0.0
    %1630 = vmatprep.subr.mxu0 0.0
    %1631 = vmatpush1.msra.mxu0 0.0
    %1632 = vmatprep.subr.mxu0 0.0
    %1633 = vmatpush1.msra.mxu0 0.0
    %1634 = vmatprep.subr.mxu0 0.0
    %1635 = vmatpush1.msra.mxu0 0.0
    %1636 = vmatprep.subr.mxu0 0.0
    %1637 = vmatpush1.msra.mxu0 0.0
    %1638 = vmatprep.subr.mxu0 0.0
    %1639 = vmatpush1.msra.mxu0 %v1600
    %1640 = vmatprep.subr.mxu0 0.0
    %1641 = vmatpush1.msra.mxu0 %v1599
    %1642 = vmatprep.subr.mxu0 0.0
    %1643 = vmatpush1.msra.mxu0 %v1598
    %1644 = vmatprep.subr.mxu0 0.0
    %1645 = vmatpush1.msra.mxu0 %v1597
    %1646 = vmatprep.subr.mxu0 0.0
    %1647 = vmatpush2.msra.mxu0 0.0
    %1648 = vmatprep.subr.mxu0 0.0
    %1649 = vmatpush2.msra.mxu0 0.0
    %1650 = vmatprep.subr.mxu0 0.0
    %1651 = vmatpush2.msra.mxu0 0.0
    %1652 = vmatprep.subr.mxu0 0.0
    %1653 = vmatpush2.msra.mxu0 0.0
    %1654 = vmatprep.subr.mxu0 0.0
    %1655 = vmatpush2.msra.mxu0 0.0
    %1656 = vmatprep.subr.mxu0 0.0
    %1657 = vmatpush2.msra.mxu0 0.0
    %1658 = vmatprep.subr.mxu0 0.0
    %1659 = vmatpush2.msra.mxu0 0.0
    %1660 = vmatprep.subr.mxu0 0.0
    %1661 = vmatpush2.msra.mxu0 0.0
    %1662 = vmatprep.subr.mxu0 0.0
    %1663 = vmatpush2.msra.mxu0 0.0
    %1664 = vmatprep.subr.mxu0 0.0
    %1665 = vmatpush2.msra.mxu0 0.0
    %1666 = vmatprep.subr.mxu0 0.0
    %1667 = vmatpush2.msra.mxu0 0.0
    %1668 = vmatprep.subr.mxu0 0.0
    %1669 = vmatpush2.msra.mxu0 0.0
    %1670 = vmatprep.subr.mxu0 0.0
    %1671 = vmatpush2.msra.mxu0 0.0
    %1672 = vmatprep.subr.mxu0 0.0
    %1673 = vmatpush2.msra.mxu0 0.0
    %1674 = vmatprep.subr.mxu0 0.0
    %1675 = vmatpush2.msra.mxu0 0.0
    %1676 = vmatprep.subr.mxu0 0.0
    %1677 = vmatpush2.msra.mxu0 0.0
    %1678 = vmatprep.mubr.f32.mxu0 0.0
    %1679 = vmatmul.mubr.f32.gmra.mxu0 %v1609
    %v1680 = vpop.f32.mrf.mxu0
    %v1681 = vadd.f32 %v1606, %v1680
    %v1682 = vpop.f32.mrf.mxu0
    %1683 = vmatprep.mubr.f32.mxu0 0.0
    %1684 = vmatmul.mubr.f32.gmra.mxu0 %v1612
    %v1685 = vpop.f32.mrf.mxu0
    %v1686 = vadd.f32 %v1606, %v1685
    %v1687 = vpop.f32.mrf.mxu0
    %1688 = vdwg.mxu0
    %v1689 = vmax.f32 %v1681, 0.0
    %v1690 = vmax.f32 %v1686, 0.0
    %v1691 = vld [vmem:[%s5] sm:$0xff]
    %v1692 = vld [vmem:[%s5 + $0x8] sm:$0xff]
    %v1693 = vld [vmem:[%s5 + $0x10] sm:$0xff]
    %v1694 = vld [vmem:[%s5 + $0x18] sm:$0xff]
    %v1695 = vld [vmem:[%s6] sm:$0x1]
    %v1697 = vlaneseq
    %v1698 = vshrl.u32 %v1697, 7
    %v1699 = vsub.s32 0, %v1698
    %v1700 = vrot.slane %v1695, %v1699
    %v1703 = vsel %vm171, %v1689, 0
    %v1706 = vsel %vm171, %v1690, 0
    %1708 = vmatprep.subr.mxu0 0.0
    %1709 = vmatpush1.msra.mxu0 0.0
    %1710 = vmatprep.subr.mxu0 0.0
    %1711 = vmatpush1.msra.mxu0 0.0
    %1712 = vmatprep.subr.mxu0 0.0
    %1713 = vmatpush1.msra.mxu0 0.0
    %1714 = vmatprep.subr.mxu0 0.0
    %1715 = vmatpush1.msra.mxu0 0.0
    %1716 = vmatprep.subr.mxu0 0.0
    %1717 = vmatpush1.msra.mxu0 0.0
    %1718 = vmatprep.subr.mxu0 0.0
    %1719 = vmatpush1.msra.mxu0 0.0
    %1720 = vmatprep.subr.mxu0 0.0
    %1721 = vmatpush1.msra.mxu0 0.0
    %1722 = vmatprep.subr.mxu0 0.0
    %1723 = vmatpush1.msra.mxu0 0.0
    %1724 = vmatprep.subr.mxu0 0.0
    %1725 = vmatpush1.msra.mxu0 0.0
    %1726 = vmatprep.subr.mxu0 0.0
    %1727 = vmatpush1.msra.mxu0 0.0
    %1728 = vmatprep.subr.mxu0 0.0
    %1729 = vmatpush1.msra.mxu0 0.0
    %1730 = vmatprep.subr.mxu0 0.0
    %1731 = vmatpush1.msra.mxu0 0.0
    %1732 = vmatprep.subr.mxu0 0.0
    %1733 = vmatpush1.msra.mxu0 %v1694
    %1734 = vmatprep.subr.mxu0 0.0
    %1735 = vmatpush1.msra.mxu0 %v1693
    %1736 = vmatprep.subr.mxu0 0.0
    %1737 = vmatpush1.msra.mxu0 %v1692
    %1738 = vmatprep.subr.mxu0 0.0
    %1739 = vmatpush1.msra.mxu0 %v1691
    %1740 = vmatprep.subr.mxu0 0.0
    %1741 = vmatpush2.msra.mxu0 0.0
    %1742 = vmatprep.subr.mxu0 0.0
    %1743 = vmatpush2.msra.mxu0 0.0
    %1744 = vmatprep.subr.mxu0 0.0
    %1745 = vmatpush2.msra.mxu0 0.0
    %1746 = vmatprep.subr.mxu0 0.0
    %1747 = vmatpush2.msra.mxu0 0.0
    %1748 = vmatprep.subr.mxu0 0.0
    %1749 = vmatpush2.msra.mxu0 0.0
    %1750 = vmatprep.subr.mxu0 0.0
    %1751 = vmatpush2.msra.mxu0 0.0
    %1752 = vmatprep.subr.mxu0 0.0
    %1753 = vmatpush2.msra.mxu0 0.0
    %1754 = vmatprep.subr.mxu0 0.0
    %1755 = vmatpush2.msra.mxu0 0.0
    %1756 = vmatprep.subr.mxu0 0.0
    %1757 = vmatpush2.msra.mxu0 0.0
    %1758 = vmatprep.subr.mxu0 0.0
    %1759 = vmatpush2.msra.mxu0 0.0
    %1760 = vmatprep.subr.mxu0 0.0
    %1761 = vmatpush2.msra.mxu0 0.0
    %1762 = vmatprep.subr.mxu0 0.0
    %1763 = vmatpush2.msra.mxu0 0.0
    %1764 = vmatprep.subr.mxu0 0.0
    %1765 = vmatpush2.msra.mxu0 0.0
    %1766 = vmatprep.subr.mxu0 0.0
    %1767 = vmatpush2.msra.mxu0 0.0
    %1768 = vmatprep.subr.mxu0 0.0
    %1769 = vmatpush2.msra.mxu0 0.0
    %1770 = vmatprep.subr.mxu0 0.0
    %1771 = vmatpush2.msra.mxu0 0.0
    %1772 = vmatprep.mubr.f32.mxu0 0.0
    %1773 = vmatmul.mubr.f32.gmra.mxu0 %v1703
    %v1774 = vpop.f32.mrf.mxu0
    %v1775 = vadd.f32 %v1700, %v1774
    %v1776 = vpop.f32.mrf.mxu0
    %1777 = vmatprep.mubr.f32.mxu0 0.0
    %1778 = vmatmul.mubr.f32.gmra.mxu0 %v1706
    %v1779 = vpop.f32.mrf.mxu0
    %v1780 = vadd.f32 %v1700, %v1779
    %v1781 = vpop.f32.mrf.mxu0
    %1782 = vdwg.mxu0
    %1783 = vst [vmem:[#allocation2] sm:$0xff] %v1775
    %1784 = vst [vmem:[#allocation2 + $0x8] sm:$0xff] %v1780
    // Predicated region
    $region30: #{tpu_custom_call.1} parent=1 // pred_check
      _
    $region31: #{tpu_custom_call.1} parent=1 // pred_check_branch
      %1786 = sbr.rel (0) target = $region33
    $region32: #{tpu_custom_call.1} parent=1 // pred_region
      %s1788 = ssub.s32 256, 256
      %1789 = vsyncadd [#allocation3], %s1788
      %s1790 = sshll.u32 [#allocation2], 4
      %s1791 = int_to_ptr.vmem [resolvable:$true] %s1790
      %1796 = dma.vmem_to_hbm [thread:$0]  %s1791, 256, %s7, [#allocation3], 128, 128, 8
    $region33: #{tpu_custom_call.1} parent=1 // pred_fallthru
      _
    // Predicated region
    $region34: #{tpu_custom_call.1} parent=1 // pred_check
      _
    $region35: #{tpu_custom_call.1} parent=1 // pred_check_branch
      %1798 = sbr.rel (0) target = $region37
    $region36: #{tpu_custom_call.1} parent=1 // pred_region
      %1799 = dma.done [#allocation3], 256
    $region37: #{tpu_custom_call.1} parent=1 // pred_fallthru
      _
    %1800 = vsyncpa [#allocation3], 1

</llo_original>
